<compile_context>
chip_gen: v6e
topology: v6e:2x2x1
jax: 0.10.0
libtpu: 0.0.40
codegen_flags: <defaults>
</compile_context>

<pallas_src>
import functools

import jax
import jax.numpy as jnp
from jax.experimental import pallas as pl
from jax.experimental.pallas import tpu as pltpu

LANE = 128
SUB = 8


def _round_up(n, m):
    return ((n + m - 1) // m) * m


def _pad_axis(a, to, axis):
    pad = to - a.shape[axis]
    if pad <= 0:
        return a
    cfg = [(0, 0)] * a.ndim
    cfg[axis] = (0, pad)
    return jnp.pad(a, cfg)


# ----------------------------- Pallas kernel ------------------------------ #

def _adaptive_mlp_kernel(thr_ref, x_ref, w0_ref, b0_ref, wres_ref, bres_ref,
                         wout_ref, bout_ref, z_ref, out_ref, h_ref):
    """One grid cell = (sample s, batch row-tile b, layer step l).

    thr_ref  : SMEM (1,) int32    sampled depth (number of active MLP blocks)
    x_ref    : (TB, Din)   bf16   input rows of this row tile
    w0_ref   : (Din, Wp)   bf16   layer-0 weight (resident)
    b0_ref   : (1, Wp)     f32
    wres_ref : (1, Wp, Wp) bf16   residual weight streamed per layer step
    bres_ref : (1, 1, Wp)  f32
    wout_ref : (Wp, Op)    bf16   output head (resident)
    bout_ref : (1, Op)     f32
    z_ref    : (1, 1, 1, Wp) f32  structure mask Z[s, l]
    out_ref  : (1, TB, Op) f32
    h_ref    : (TB, Wp)    f32    persistent hidden-state accumulator
    """
    l = pl.program_id(2)
    n_l = pl.num_programs(2)
    thr = thr_ref[0]
    z = z_ref[0, 0]                                       # (1, Wp)

    # --- layer 0 (input projection): initializes the accumulator ----------
    @pl.when(l == 0)
    def _():
        h0 = jnp.dot(x_ref[...], w0_ref[...],
                     preferred_element_type=jnp.float32)
        h0 = jnp.maximum(h0 + b0_ref[...], 0.0)
        h_ref[...] = h0 * z

    # --- residual layers 1..thr-1; layers >= thr are fully skipped --------
    @pl.when(jnp.logical_and(l > 0, l < thr))
    def _():
        h = h_ref[...]
        hn = jnp.dot(h.astype(jnp.bfloat16), wres_ref[0],
                     preferred_element_type=jnp.float32)
        hn = jnp.maximum(hn + bres_ref[0], 0.0)
        h_ref[...] = hn * z + h

    # --- output head on the last layer step -------------------------------
    @pl.when(l == n_l - 1)
    def _():
        out = jnp.dot(h_ref[...].astype(jnp.bfloat16), wout_ref[...],
                      preferred_element_type=jnp.float32)
        out_ref[0] = (out + bout_ref[...]).astype(out_ref.dtype)


# ------------------------------- wrappers ---------------------------------- #

def prepare_adaptive_mlp_params(params):
    """One-time parameter prep (lane padding + bf16 cast of MXU operands).

    Hoisted out of the per-forward hot path, per the perf review.
    Padded hidden/output units are exactly zero through relu/mask/residual.
    """
    w0, b0, wres, bres, wout, bout = params
    W = w0.shape[1]
    O = wout.shape[1]
    Wp = _round_up(W, LANE)
    Op = _round_up(O, LANE)
    w0p = _pad_axis(w0, Wp, 1).astype(jnp.bfloat16)
    b0p = _pad_axis(b0, Wp, 1).astype(jnp.float32)
    wresp = _pad_axis(_pad_axis(wres, Wp, 1), Wp, 2).astype(jnp.bfloat16)
    bresp = _pad_axis(bres, Wp, 2).astype(jnp.float32)
    woutp = _pad_axis(_pad_axis(wout, Wp, 0), Op, 1).astype(jnp.bfloat16)
    boutp = _pad_axis(bout, Op, 1).astype(jnp.float32)
    return (w0p, b0p, wresp, bresp, woutp, boutp)


@functools.partial(jax.jit, static_argnames=("out_dim",))
def adaptive_mlp_forward(x_nchw, prepared, Z, threshold, *, out_dim):
    """Returns act_vec of shape (num_samples, B, out_dim).

    Z         : (S, L+1, max_width) 0/1 structure masks (one row per layer).
    threshold : sampled depth; may be a traced jnp scalar (no recompilation
                across sampled depths).
    """
    w0p, b0p, wresp, bresp, woutp, boutp = prepared
    B = x_nchw.shape[0]
    x = x_nchw.reshape(B, -1).astype(jnp.bfloat16)        # x.view(B, -1)
    d_in = x.shape[1]
    Wp = w0p.shape[1]
    Op = woutp.shape[1]
    L = wresp.shape[0]
    S = Z.shape[0]

    # Row tile for the matmul M dimension: sublane-dense, and >=128/256 rows
    # at realistic batch sizes so the MXU tile is actually filled.
    if B >= 256:
        TB = 256
    elif B >= 128:
        TB = 128
    else:
        TB = _round_up(B, SUB)
    Bp = _round_up(B, TB)
    n_btiles = Bp // TB

    # Padded rows produce junk that is sliced off below (rows are independent).
    xp = _pad_axis(x, Bp, 0)                              # (Bp, Din) bf16

    # Raw masks, lane-padded only (no B-scaled broadcast).  Reshape to 4-D so
    # the streamed (1,1,1,Wp) block's last two dims equal the array's.
    Zp = _pad_axis(Z.astype(jnp.float32), Wp, 2).reshape(S, L + 1, 1, Wp)

    # Eval-mode clamp, traced-safe (works for Python ints and jnp scalars).
    thr = jnp.minimum(jnp.asarray(threshold, jnp.int32), L + 1).reshape(1)

    Lw = max(L - 1, 0)

    def _wres_index(s, b, l, thr_ref):
        # Active residual layer at step l uses wres[l-1]; for steps beyond the
        # sampled depth, pin the index to the last active layer so Pallas
        # issues no new DMA (and the kernel's pl.when skips the matmul).
        last_active = jnp.minimum(l, thr_ref[0] - 1)
        idx = jnp.maximum(last_active - 1, 0)
        return (jnp.minimum(idx, Lw), 0, 0)

    grid = (S, n_btiles, L + 1)

    out_padded = pl.pallas_call(
        _adaptive_mlp_kernel,
        out_shape=jax.ShapeDtypeStruct((S, Bp, Op), jnp.float32),
        grid_spec=pltpu.PrefetchScalarGridSpec(
            num_scalar_prefetch=1,
            grid=grid,
            in_specs=[
                pl.BlockSpec((TB, d_in), lambda s, b, l, thr_ref: (b, 0)),
                pl.BlockSpec((d_in, Wp), lambda s, b, l, thr_ref: (0, 0)),
                pl.BlockSpec((1, Wp), lambda s, b, l, thr_ref: (0, 0)),
                pl.BlockSpec((1, Wp, Wp), _wres_index),
                pl.BlockSpec((1, 1, Wp), _wres_index),
                pl.BlockSpec((Wp, Op), lambda s, b, l, thr_ref: (0, 0)),
                pl.BlockSpec((1, Op), lambda s, b, l, thr_ref: (0, 0)),
                pl.BlockSpec((1, 1, 1, Wp),
                             lambda s, b, l, thr_ref: (s, l, 0, 0)),
            ],
            out_specs=pl.BlockSpec((1, TB, Op),
                                   lambda s, b, l, thr_ref: (s, b, 0)),
            scratch_shapes=[pltpu.VMEM((TB, Wp), jnp.float32)],
        ),
        compiler_params=pltpu.CompilerParams(
            dimension_semantics=("parallel", "parallel", "arbitrary"),
            vmem_limit_bytes=32 * 1024 * 1024,
        ),
    )(thr, xp, w0p, b0p, wresp, bresp, woutp, boutp, Zp)

    return out_padded[:, :B, :out_dim]


# ------------------------------ reference ---------------------------------- #

def adaptive_mlp_reference(x_nchw, params, Z, threshold):
    """Pure-JAX f32 reference of the PyTorch forward (last=False)."""
    B = x_nchw.shape[0]
    x = x_nchw.reshape(B, -1).astype(jnp.float32)
    w0, b0, wres, bres, wout, bout = params
    L = wres.shape[0]
    thr = min(int(threshold), L + 1)          # same eval-mode clamp as kernel
    outs = []
    for s in range(Z.shape[0]):
        h = jnp.maximum(x @ w0 + b0, 0.0) * Z[s, 0][None, :]
        for l in range(1, thr):
            hn = jnp.maximum(h @ wres[l - 1] + bres[l - 1], 0.0)
            h = hn * Z[s, l][None, :] + h
        outs.append(h @ wout + bout)
    return jnp.stack(outs, axis=0)


def make_params(key, input_feature_dim, max_width, truncation_level,
                out_feature_dim):
    ks = jax.random.split(key, 6)
    s0 = 1.0 / jnp.sqrt(input_feature_dim)
    sr = 1.0 / jnp.sqrt(max_width)
    w0 = jax.random.uniform(ks[0], (input_feature_dim, max_width), jnp.float32,
                            -s0, s0)
    b0 = jax.random.uniform(ks[1], (1, max_width), jnp.float32, -s0, s0)
    wres = jax.random.uniform(ks[2], (truncation_level, max_width, max_width),
                              jnp.float32, -sr, sr)
    bres = jax.random.uniform(ks[3], (truncation_level, 1, max_width),
                              jnp.float32, -sr, sr)
    wout = jax.random.uniform(ks[4], (max_width, out_feature_dim), jnp.float32,
                              -sr, sr)
    bout = jax.random.uniform(ks[5], (1, out_feature_dim), jnp.float32,
                              -sr, sr)
    return (w0, b0, wres, bres, wout, bout)


if __name__ == "__main__":
    # Small shapes consistent with the module's forward (NCHW image input).
    B, C, H, W_sp = 2, 4, 16, 16
    input_feature_dim = C * H * W_sp           # x.view(B, -1)
    max_width = 32
    truncation_level = 3                       # => len(layers) = 4
    out_feature_dim = 10
    num_samples = 2
    threshold = 3                              # sampled network depth (<= 4)

    key = jax.random.PRNGKey(0)
    k_x, k_p, k_z = jax.random.split(key, 3)

    x = jax.random.normal(k_x, (B, C, H, W_sp), jnp.float32)
    params = make_params(k_p, input_feature_dim, max_width,
                         truncation_level, out_feature_dim)

    # TODO(synk): NetworkStructureSampler (Beta-Bernoulli posterior sampling of
    # Z / threshold) has no Pallas equivalent; deterministic masks stand in.
    Z = (jax.random.uniform(
        k_z, (num_samples, truncation_level + 1, max_width)) < 0.75
         ).astype(jnp.float32)

    prepared = prepare_adaptive_mlp_params(params)     # one-time weight prep
    act_vec = adaptive_mlp_forward(x, prepared, Z, threshold,
                                   out_dim=out_feature_dim)
    act_vec = jax.block_until_ready(act_vec)

    ref = adaptive_mlp_reference(x, params, Z, threshold)
    assert act_vec.shape == (num_samples, B, out_feature_dim)
    # bf16 MXU inputs with f32 accumulation -> relaxed tolerance vs f32 ref.
    assert jnp.allclose(act_vec, ref, atol=3e-2, rtol=3e-2), float(
        jnp.max(jnp.abs(act_vec - ref)))

    print("KERNEL_OK")
</pallas_src>

<mosaic_0001>
module attributes {stable_mosaic.version = 11 : i64} {
  func.func @_adaptive_mlp_kernel(%arg0: i32, %arg1: i32, %arg2: i32, %arg3: memref<1xi32, #tpu.memory_space<smem>>, %arg4: memref<8x1024xbf16, #tpu.memory_space<vmem>>, %arg5: memref<1024x128xbf16, #tpu.memory_space<vmem>>, %arg6: memref<1x128xf32, #tpu.memory_space<vmem>>, %arg7: memref<1x128x128xbf16, #tpu.memory_space<vmem>>, %arg8: memref<1x1x128xf32, #tpu.memory_space<vmem>>, %arg9: memref<128x128xbf16, #tpu.memory_space<vmem>>, %arg10: memref<1x128xf32, #tpu.memory_space<vmem>>, %arg11: memref<1x1x1x128xf32, #tpu.memory_space<vmem>>, %arg12: memref<1x8x128xf32, #tpu.memory_space<vmem>>, %arg13: memref<8x128xf32, #tpu.memory_space<vmem>>) attributes {dimension_semantics = [#tpu.dimension_semantics<parallel>, #tpu.dimension_semantics<parallel>, #tpu.dimension_semantics<arbitrary>], iteration_bounds = array<i64: 2, 1, 4>, scalar_prefetch = 1 : i64, scratch_operands = 1 : i64, tpu.core_type = #tpu.core_type<tc>, window_params = [{transform_indices = @transform_0, window_bounds = array<i64: 8, 1024>}, {pipeline_mode = #tpu.pipeline_mode<synchronous>, transform_indices = @transform_1, window_bounds = array<i64: 1024, 128>}, {pipeline_mode = #tpu.pipeline_mode<synchronous>, transform_indices = @transform_2, window_bounds = array<i64: 1, 128>}, {transform_indices = @transform_3, window_bounds = array<i64: 1, 128, 128>}, {transform_indices = @transform_4, window_bounds = array<i64: 1, 1, 128>}, {pipeline_mode = #tpu.pipeline_mode<synchronous>, transform_indices = @transform_5, window_bounds = array<i64: 128, 128>}, {pipeline_mode = #tpu.pipeline_mode<synchronous>, transform_indices = @transform_6, window_bounds = array<i64: 1, 128>}, {transform_indices = @transform_7, window_bounds = array<i64: 1, 1, 1, 128>}, {transform_indices = @transform_8, window_bounds = array<i64: 1, 8, 128>}]} {
    %c0 = arith.constant 0 : index
    %0 = memref.load %arg3[%c0] : memref<1xi32, #tpu.memory_space<smem>>
    %c0_0 = arith.constant 0 : index
    %c0_1 = arith.constant 0 : index
    %c0_2 = arith.constant 0 : index
    %c0_3 = arith.constant 0 : index
    %1 = vector.load %arg11[%c0_0, %c0_1, %c0_2, %c0_3] : memref<1x1x1x128xf32, #tpu.memory_space<vmem>>, vector<1x1x1x128xf32>
    %2 = vector.shape_cast %1 : vector<1x1x1x128xf32> to vector<1x128xf32>
    %c0_i32 = arith.constant 0 : i32
    %3 = arith.cmpi eq, %arg2, %c0_i32 : i32
    %4 = arith.extui %3 : i1 to i32
    %c0_i32_4 = arith.constant 0 : i32
    %5 = arith.cmpi ne, %4, %c0_i32_4 : i32
    scf.if %5 {
      %c0_8 = arith.constant 0 : index
      %c0_9 = arith.constant 0 : index
      %14 = vector.load %arg4[%c0_8, %c0_9] : memref<8x1024xbf16, #tpu.memory_space<vmem>>, vector<8x1024xbf16>
      %c0_10 = arith.constant 0 : index
      %c0_11 = arith.constant 0 : index
      %15 = vector.load %arg5[%c0_10, %c0_11] : memref<1024x128xbf16, #tpu.memory_space<vmem>>, vector<1024x128xbf16>
      %cst = arith.constant dense<0.000000e+00> : vector<8x128xf32>
      %16 = tpu.matmul %14, %15, %cst {dimension_numbers = #tpu.dot_dimension_numbers<[1], [0], [0], [1], [0, 0, 1, 1], [], []>} : vector<8x1024xbf16>, vector<1024x128xbf16>, vector<8x128xf32> -> vector<8x128xf32>
      %c0_12 = arith.constant 0 : index
      %c0_13 = arith.constant 0 : index
      %17 = vector.load %arg6[%c0_12, %c0_13] : memref<1x128xf32, #tpu.memory_space<vmem>>, vector<1x128xf32>
      %18 = vector.broadcast %17 : vector<1x128xf32> to vector<8x128xf32>
      %19 = arith.addf %16, %18 : vector<8x128xf32>
      %cst_14 = arith.constant 0.000000e+00 : f32
      %20 = vector.broadcast %cst_14 : f32 to vector<8x128xf32>
      %21 = arith.maximumf %19, %20 : vector<8x128xf32>
      %22 = vector.broadcast %2 : vector<1x128xf32> to vector<8x128xf32>
      %23 = arith.mulf %21, %22 : vector<8x128xf32>
      %c0_15 = arith.constant 0 : index
      %c0_16 = arith.constant 0 : index
      %24 = vector.load %arg13[%c0_15, %c0_16] : memref<8x128xf32, #tpu.memory_space<vmem>>, vector<8x128xf32>
      tpu.vector_store %arg13[%c0_15, %c0_16], %23 {strides = array<i32>} : memref<8x128xf32, #tpu.memory_space<vmem>>, vector<8x128xf32>,
    } else {
    }
    %c0_i32_5 = arith.constant 0 : i32
    %6 = arith.cmpi sgt, %arg2, %c0_i32_5 : i32
    %7 = arith.cmpi slt, %arg2, %0 : i32
    %8 = arith.andi %6, %7 : i1
    %9 = arith.extui %8 : i1 to i32
    %c0_i32_6 = arith.constant 0 : i32
    %10 = arith.cmpi ne, %9, %c0_i32_6 : i32
    scf.if %10 {
      %c0_8 = arith.constant 0 : index
      %c0_9 = arith.constant 0 : index
      %14 = vector.load %arg13[%c0_8, %c0_9] : memref<8x128xf32, #tpu.memory_space<vmem>>, vector<8x128xf32>
      %15 = arith.truncf %14 : vector<8x128xf32> to vector<8x128xbf16>
      %c0_10 = arith.constant 0 : index
      %c0_11 = arith.constant 0 : index
      %c0_12 = arith.constant 0 : index
      %16 = vector.load %arg7[%c0_10, %c0_11, %c0_12] : memref<1x128x128xbf16, #tpu.memory_space<vmem>>, vector<1x128x128xbf16>
      %17 = vector.shape_cast %16 : vector<1x128x128xbf16> to vector<128x128xbf16>
      %cst = arith.constant dense<0.000000e+00> : vector<8x128xf32>
      %18 = tpu.matmul %15, %17, %cst {dimension_numbers = #tpu.dot_dimension_numbers<[1], [0], [0], [1], [0, 0, 1, 1], [], []>} : vector<8x128xbf16>, vector<128x128xbf16>, vector<8x128xf32> -> vector<8x128xf32>
      %c0_13 = arith.constant 0 : index
      %c0_14 = arith.constant 0 : index
      %c0_15 = arith.constant 0 : index
      %19 = vector.load %arg8[%c0_13, %c0_14, %c0_15] : memref<1x1x128xf32, #tpu.memory_space<vmem>>, vector<1x1x128xf32>
      %20 = vector.shape_cast %19 : vector<1x1x128xf32> to vector<1x128xf32>
      %21 = vector.broadcast %20 : vector<1x128xf32> to vector<8x128xf32>
      %22 = arith.addf %18, %21 : vector<8x128xf32>
      %cst_16 = arith.constant 0.000000e+00 : f32
      %23 = vector.broadcast %cst_16 : f32 to vector<8x128xf32>
      %24 = arith.maximumf %22, %23 : vector<8x128xf32>
      %25 = vector.broadcast %2 : vector<1x128xf32> to vector<8x128xf32>
      %26 = arith.mulf %24, %25 : vector<8x128xf32>
      %27 = arith.addf %26, %14 : vector<8x128xf32>
      %c0_17 = arith.constant 0 : index
      %c0_18 = arith.constant 0 : index
      %28 = vector.load %arg13[%c0_17, %c0_18] : memref<8x128xf32, #tpu.memory_space<vmem>>, vector<8x128xf32>
      tpu.vector_store %arg13[%c0_17, %c0_18], %27 {strides = array<i32>} : memref<8x128xf32, #tpu.memory_space<vmem>>, vector<8x128xf32>,
    } else {
    }
    %c3_i32 = arith.constant 3 : i32
    %11 = arith.cmpi eq, %arg2, %c3_i32 : i32
    %12 = arith.extui %11 : i1 to i32
    %c0_i32_7 = arith.constant 0 : i32
    %13 = arith.cmpi ne, %12, %c0_i32_7 : i32
    scf.if %13 {
      %c0_8 = arith.constant 0 : index
      %c0_9 = arith.constant 0 : index
      %14 = vector.load %arg13[%c0_8, %c0_9] : memref<8x128xf32, #tpu.memory_space<vmem>>, vector<8x128xf32>
      %15 = arith.truncf %14 : vector<8x128xf32> to vector<8x128xbf16>
      %c0_10 = arith.constant 0 : index
      %c0_11 = arith.constant 0 : index
      %16 = vector.load %arg9[%c0_10, %c0_11] : memref<128x128xbf16, #tpu.memory_space<vmem>>, vector<128x128xbf16>
      %cst = arith.constant dense<0.000000e+00> : vector<8x128xf32>
      %17 = tpu.matmul %15, %16, %cst {dimension_numbers = #tpu.dot_dimension_numbers<[1], [0], [0], [1], [0, 0, 1, 1], [], []>} : vector<8x128xbf16>, vector<128x128xbf16>, vector<8x128xf32> -> vector<8x128xf32>
      %c0_12 = arith.constant 0 : index
      %c0_13 = arith.constant 0 : index
      %18 = vector.load %arg10[%c0_12, %c0_13] : memref<1x128xf32, #tpu.memory_space<vmem>>, vector<1x128xf32>
      %19 = vector.broadcast %18 : vector<1x128xf32> to vector<8x128xf32>
      %20 = arith.addf %17, %19 : vector<8x128xf32>
      %c0_14 = arith.constant 0 : index
      %c0_15 = arith.constant 0 : index
      %c0_16 = arith.constant 0 : index
      %21 = vector.load %arg12[%c0_14, %c0_15, %c0_16] : memref<1x8x128xf32, #tpu.memory_space<vmem>>, vector<1x8x128xf32>
      %22 = vector.shape_cast %21 : vector<1x8x128xf32> to vector<8x128xf32>
      %23 = vector.shape_cast %20 : vector<8x128xf32> to vector<1x8x128xf32>
      tpu.vector_store %arg12[%c0_14, %c0_15, %c0_16], %23 {strides = array<i32>} : memref<1x8x128xf32, #tpu.memory_space<vmem>>, vector<1x8x128xf32>,
    } else {
    }
    return
  }
  func.func @transform_0(%arg0: i32, %arg1: i32, %arg2: i32, %arg3: memref<1xi32, #tpu.memory_space<smem>>) -> (i32, i32) {
    %c0_i32 = arith.constant 0 : i32
    %c0_i32_0 = arith.constant 0 : i32
    return %arg1, %c0_i32 : i32, i32
  }
  func.func @transform_1(%arg0: i32, %arg1: i32, %arg2: i32, %arg3: memref<1xi32, #tpu.memory_space<smem>>) -> (i32, i32) {
    %c0_i32 = arith.constant 0 : i32
    %c0_i32_0 = arith.constant 0 : i32
    %c0_i32_1 = arith.constant 0 : i32
    return %c0_i32, %c0_i32_0 : i32, i32
  }
  func.func @transform_2(%arg0: i32, %arg1: i32, %arg2: i32, %arg3: memref<1xi32, #tpu.memory_space<smem>>) -> (i32, i32) {
    %c0_i32 = arith.constant 0 : i32
    %c0_i32_0 = arith.constant 0 : i32
    %c0_i32_1 = arith.constant 0 : i32
    return %c0_i32, %c0_i32_0 : i32, i32
  }
  func.func @transform_3(%arg0: i32, %arg1: i32, %arg2: i32, %arg3: memref<1xi32, #tpu.memory_space<smem>>) -> (i32, i32, i32) {
    %c0 = arith.constant 0 : index
    %0 = memref.load %arg3[%c0] : memref<1xi32, #tpu.memory_space<smem>>
    %c1_i32 = arith.constant 1 : i32
    %1 = arith.subi %0, %c1_i32 : i32
    %2 = arith.minsi %arg2, %1 : i32
    %c1_i32_0 = arith.constant 1 : i32
    %3 = arith.subi %2, %c1_i32_0 : i32
    %c0_i32 = arith.constant 0 : i32
    %4 = arith.maxsi %3, %c0_i32 : i32
    %c2_i32 = arith.constant 2 : i32
    %5 = arith.minsi %4, %c2_i32 : i32
    %c0_i32_1 = arith.constant 0 : i32
    %c0_i32_2 = arith.constant 0 : i32
    %c0_i32_3 = arith.constant 0 : i32
    return %5, %c0_i32_1, %c0_i32_2 : i32, i32, i32
  }
  func.func @transform_4(%arg0: i32, %arg1: i32, %arg2: i32, %arg3: memref<1xi32, #tpu.memory_space<smem>>) -> (i32, i32, i32) {
    %c0 = arith.constant 0 : index
    %0 = memref.load %arg3[%c0] : memref<1xi32, #tpu.memory_space<smem>>
    %c1_i32 = arith.constant 1 : i32
    %1 = arith.subi %0, %c1_i32 : i32
    %2 = arith.minsi %arg2, %1 : i32
    %c1_i32_0 = arith.constant 1 : i32
    %3 = arith.subi %2, %c1_i32_0 : i32
    %c0_i32 = arith.constant 0 : i32
    %4 = arith.maxsi %3, %c0_i32 : i32
    %c2_i32 = arith.constant 2 : i32
    %5 = arith.minsi %4, %c2_i32 : i32
    %c0_i32_1 = arith.constant 0 : i32
    %c0_i32_2 = arith.constant 0 : i32
    %c0_i32_3 = arith.constant 0 : i32
    return %5, %c0_i32_1, %c0_i32_2 : i32, i32, i32
  }
  func.func @transform_5(%arg0: i32, %arg1: i32, %arg2: i32, %arg3: memref<1xi32, #tpu.memory_space<smem>>) -> (i32, i32) {
    %c0_i32 = arith.constant 0 : i32
    %c0_i32_0 = arith.constant 0 : i32
    %c0_i32_1 = arith.constant 0 : i32
    return %c0_i32, %c0_i32_0 : i32, i32
  }
  func.func @transform_6(%arg0: i32, %arg1: i32, %arg2: i32, %arg3: memref<1xi32, #tpu.memory_space<smem>>) -> (i32, i32) {
    %c0_i32 = arith.constant 0 : i32
    %c0_i32_0 = arith.constant 0 : i32
    %c0_i32_1 = arith.constant 0 : i32
    return %c0_i32, %c0_i32_0 : i32, i32
  }
  func.func @transform_7(%arg0: i32, %arg1: i32, %arg2: i32, %arg3: memref<1xi32, #tpu.memory_space<smem>>) -> (i32, i32, i32, i32) {
    %c0_i32 = arith.constant 0 : i32
    %c0_i32_0 = arith.constant 0 : i32
    %c0_i32_1 = arith.constant 0 : i32
    return %arg0, %arg2, %c0_i32, %c0_i32_0 : i32, i32, i32, i32
  }
  func.func @transform_8(%arg0: i32, %arg1: i32, %arg2: i32, %arg3: memref<1xi32, #tpu.memory_space<smem>>) -> (i32, i32, i32) {
    %c0_i32 = arith.constant 0 : i32
    %c0_i32_0 = arith.constant 0 : i32
    return %arg0, %arg1, %c0_i32 : i32, i32, i32
  }
}

</mosaic_0001>

<llo_original>
// kernel: adaptive_mlp_forward.1
$region0: #{adaptive_mlp_forward.1}
  #allocation0 [shape = 'u32[]', space=smem, size = 0x4, offset = 0x4, fixed_abs, tag = 'smem constant byte address 0x4 - core index']
  #allocation1 [shape = 'u32[144,128]{1,0:T(1,128)}', space=vmem, size = 0x12000, scoped, tag = 'internal scratch']
  #allocation2 [shape = 'f32[8,128]{1,0:T(8,128)}', space=vmem, size = 0x1000, scoped, tag = 'scratch operand']
  #allocation3 [shape = 's32[1]{0}', space=sflag, size = 0x4, scoped, tag = 'scoped memory for adaptive_mlp_forward.1']
  #allocation4 [shape = 's32[1]{0:T(128)S(6)}', space=smem, size = 0x200, scoped, tag = 'prefetched SMEM operand 0']
  %s0 = inlined_call_operand.<no memory space> [shape: s32[1], index: 0, kind: input, shape index: {}]
  %s1 = inlined_call_operand.vmem [shape: bf16[8,1024], index: 1, kind: input, shape index: {}]
  %s2 = inlined_call_operand.hbm [shape: bf16[1024,128], index: 2, kind: input, shape index: {}]
  %s3 = inlined_call_operand.vmem [shape: f32[1,128], index: 3, kind: input, shape index: {}]
  %s4 = inlined_call_operand.vmem [shape: bf16[3,128,128], index: 4, kind: input, shape index: {}]
  %s5 = inlined_call_operand.vmem [shape: f32[3,1,128], index: 5, kind: input, shape index: {}]
  %s6 = inlined_call_operand.vmem [shape: bf16[128,128], index: 6, kind: input, shape index: {}]
  %s7 = inlined_call_operand.vmem [shape: f32[1,128], index: 7, kind: input, shape index: {}]
  %s8 = inlined_call_operand.vmem [shape: f32[2,4,1,128], index: 8, kind: input, shape index: {}]
  %s9 = inlined_call_operand.vmem [shape: f32[2,8,128], index: 9, kind: output, shape index: {}]
  %s10 = sld [smem:[#allocation0]]
  $region81: #{adaptive_mlp_forward.1} parent=0
    _
  %s12 = ssub.s32 1, %s10
  %s13 = scalar_select 0, %s12, %s10
  %14 = sst [smem:[#allocation4]] %s0
  $region1: #{adaptive_mlp_forward.1} parent=0
    #allocation5 [shape = 'u8[262144]{0}', space=vmem, size = 0x40000, scoped, tag = 'input window, operand 2, single buffered']
    #allocation6 [shape = 's32[2]{0}', space=sflag, size = 0x8, scoped, tag = 'scoped memory for adaptive_mlp_forward.1']
    %15 = vsyncpa [#allocation6], 0
    loop: start=0, step=1, limit=10
    $region2: #{adaptive_mlp_forward.1} parent=1 // loop_pre_header
      _
    $region3: #{adaptive_mlp_forward.1} parent=1 // loop_header
      %s17 = sphi 0, %s21
      %p18 = scmp.ge.s32.totalorder %s17, 10
      %s24 = sphi 0, %s43
      %s25 = sphi 0, %s39
      %s26 = sphi 0, %s35
      %s27 = sphi 0, %s24
      %s28 = sphi 0, %s25
      %s29 = sphi 0, %s26
      %s30 = sphi 0, %s27
      %s31 = sphi 0, %s28
      %s32 = sphi 0, %s29
      %s46 = sphi 0, %s48
      %s49 = sphi 0, %s46
      %s50 = sphi 0, %s49
      %s66 = sphi 0, %s50
      %s70 = sphi 0, %s70
      %s72 = sphi 0, %s70
      %s73 = sphi 0, %s72
      %s87 = sphi 0, %s73
      %s91 = sphi 0, %s91
      %s93 = sphi 0, %s91
      %s94 = sphi 0, %s93
      %s108 = sphi 0, %s94
      %s132 = sphi 0, %s134
      %s135 = sphi 0, %s132
      %s136 = sphi 0, %s135
      %s152 = sphi 0, %s136
      %s176 = sphi 0, %s178
      %s179 = sphi 0, %s176
      %s180 = sphi 0, %s179
      %s196 = sphi 0, %s180
      %s200 = sphi 0, %s200
      %s202 = sphi 0, %s200
      %s203 = sphi 0, %s202
      %s217 = sphi 0, %s203
      %s221 = sphi 0, %s221
      %s223 = sphi 0, %s221
      %s224 = sphi 0, %s223
      %s238 = sphi 0, %s224
      %s246 = sphi 0, %s248
      %s249 = sphi 0, %s246
      %s250 = sphi 0, %s249
      %s266 = sphi 0, %s250
      %s274 = sphi 0, %s276
      %s277 = sphi 0, %s274
      %s278 = sphi 0, %s277
      %s294 = sphi 0, %s278
    $region4: #{adaptive_mlp_forward.1} parent=1 // loop_header_branch
      %20 = sbr.rel (%p18) target = $region8
    $region5: #{adaptive_mlp_forward.1} parent=1 // loop_body
      %s22 = ssub.s32 %s17, 1
      %s23 = ssub.s32 %s17, 2
      %s33 = sadd.s32 1, %s26
      %p34 = scmp.ge.s32.totalorder %s33, 4
      %s35 = scalar_select %p34, 0, %s33
      %s36 = sadd.s32 1, %s25
      %s37 = scalar_select %p34, %s36, %s25
      %p38 = scmp.ge.s32.totalorder %s37, 1
      %s39 = scalar_select %p38, 0, %s37
      %s40 = sadd.s32 1, %s24
      %s41 = scalar_select %p38, %s40, %s24
      %p42 = scmp.ge.s32.totalorder %s41, 2
      %s43 = scalar_select %p42, 0, %s41
      %s44 = ssub.s32 %s25, %s39
      %p45 = scmp.eq.s32.totalorder %s44, 0
      %s47 = sadd.s32 %s46, 1
      %s48 = scalar_select %p45, %s46, %s47
      %p51 = pneg %p45
      %p52 = scmp.eq.s32.totalorder %s17, 7
      %p53 = por %p51, %p52
      %p54 = scmp.ne.s32.totalorder %s46, %s49
      %p55 = scmp.eq.s32.totalorder %s17, 0
      %p56 = por %p54, %p55
      %p57 = scmp.ne.s32.totalorder %s46, %s49
      %p58 = scmp.eq.s32.totalorder %s22, 7
      %p59 = por %p57, %p58
      %p60 = scmp.ne.s32.totalorder %s49, %s50
      %p61 = scmp.eq.s32.totalorder %s22, 0
      %p62 = por %p60, %p61
      %p63 = scmp.ne.s32.totalorder %s49, %s50
      %p64 = scmp.eq.s32.totalorder %s23, 7
      %p65 = por %p63, %p64
      %p67 = scmp.ne.s32.totalorder %s50, %s66
      %p68 = scmp.eq.s32.totalorder %s23, 0
      %p69 = por %p67, %p68
      %s71 = sadd.s32 %s70, 1
      %p74 = scmp.eq.s32.totalorder %s17, 7
      %p75 = scmp.ne.s32.totalorder %s70, %s72
      %p76 = scmp.eq.s32.totalorder %s17, 0
      %p77 = por %p75, %p76
      %p78 = scmp.ne.s32.totalorder %s70, %s72
      %p79 = scmp.eq.s32.totalorder %s22, 7
      %p80 = por %p78, %p79
      %p81 = scmp.ne.s32.totalorder %s72, %s73
      %p82 = scmp.eq.s32.totalorder %s22, 0
      %p83 = por %p81, %p82
      %p84 = scmp.ne.s32.totalorder %s72, %s73
      %p85 = scmp.eq.s32.totalorder %s23, 7
      %p86 = por %p84, %p85
      %p88 = scmp.ne.s32.totalorder %s73, %s87
      %p89 = scmp.eq.s32.totalorder %s23, 0
      %p90 = por %p88, %p89
      %s92 = sadd.s32 %s91, 1
      %p95 = scmp.eq.s32.totalorder %s17, 7
      %p96 = scmp.ne.s32.totalorder %s91, %s93
      %p97 = scmp.eq.s32.totalorder %s17, 0
      %p98 = por %p96, %p97
      %p99 = scmp.ne.s32.totalorder %s91, %s93
      %p100 = scmp.eq.s32.totalorder %s22, 7
      %p101 = por %p99, %p100
      %p102 = scmp.ne.s32.totalorder %s93, %s94
      %p103 = scmp.eq.s32.totalorder %s22, 0
      %p104 = por %p102, %p103
      %p105 = scmp.ne.s32.totalorder %s93, %s94
      %p106 = scmp.eq.s32.totalorder %s23, 7
      %p107 = por %p105, %p106
      %p109 = scmp.ne.s32.totalorder %s94, %s108
      %p110 = scmp.eq.s32.totalorder %s23, 0
      %p111 = por %p109, %p110
      %s112 = sld [smem:[#allocation4]]
      %s113 = ssub.s32 %s112, 1
      %p114 = scmp.lt.s32.totalorder %s26, %s113
      %s115 = scalar_select %p114, %s26, %s113
      %s116 = ssub.s32 %s115, 1
      %p117 = scmp.gt.s32.totalorder %s116, 0
      %s118 = scalar_select %p117, %s116, 0
      %p119 = scmp.lt.s32.totalorder %s118, 2
      %s120 = scalar_select %p119, %s118, 2
      %s121 = sld [smem:[#allocation4]]
      %s122 = ssub.s32 %s121, 1
      %p123 = scmp.lt.s32.totalorder %s35, %s122
      %s124 = scalar_select %p123, %s35, %s122
      %s125 = ssub.s32 %s124, 1
      %p126 = scmp.gt.s32.totalorder %s125, 0
      %s127 = scalar_select %p126, %s125, 0
      %p128 = scmp.lt.s32.totalorder %s127, 2
      %s129 = scalar_select %p128, %s127, 2
      %s130 = ssub.s32 %s120, %s129
      %p131 = scmp.eq.s32.totalorder %s130, 0
      %s133 = sadd.s32 %s132, 1
      %s134 = scalar_select %p131, %s132, %s133
      %p137 = pneg %p131
      %p138 = scmp.eq.s32.totalorder %s17, 7
      %p139 = por %p137, %p138
      %p140 = scmp.ne.s32.totalorder %s132, %s135
      %p141 = scmp.eq.s32.totalorder %s17, 0
      %p142 = por %p140, %p141
      %p143 = scmp.ne.s32.totalorder %s132, %s135
      %p144 = scmp.eq.s32.totalorder %s22, 7
      %p145 = por %p143, %p144
      %p146 = scmp.ne.s32.totalorder %s135, %s136
      %p147 = scmp.eq.s32.totalorder %s22, 0
      %p148 = por %p146, %p147
      %p149 = scmp.ne.s32.totalorder %s135, %s136
      %p150 = scmp.eq.s32.totalorder %s23, 7
      %p151 = por %p149, %p150
      %p153 = scmp.ne.s32.totalorder %s136, %s152
      %p154 = scmp.eq.s32.totalorder %s23, 0
      %p155 = por %p153, %p154
      %s156 = sld [smem:[#allocation4]]
      %s157 = ssub.s32 %s156, 1
      %p158 = scmp.lt.s32.totalorder %s26, %s157
      %s159 = scalar_select %p158, %s26, %s157
      %s160 = ssub.s32 %s159, 1
      %p161 = scmp.gt.s32.totalorder %s160, 0
      %s162 = scalar_select %p161, %s160, 0
      %p163 = scmp.lt.s32.totalorder %s162, 2
      %s164 = scalar_select %p163, %s162, 2
      %s165 = sld [smem:[#allocation4]]
      %s166 = ssub.s32 %s165, 1
      %p167 = scmp.lt.s32.totalorder %s35, %s166
      %s168 = scalar_select %p167, %s35, %s166
      %s169 = ssub.s32 %s168, 1
      %p170 = scmp.gt.s32.totalorder %s169, 0
      %s171 = scalar_select %p170, %s169, 0
      %p172 = scmp.lt.s32.totalorder %s171, 2
      %s173 = scalar_select %p172, %s171, 2
      %s174 = ssub.s32 %s164, %s173
      %p175 = scmp.eq.s32.totalorder %s174, 0
      %s177 = sadd.s32 %s176, 1
      %s178 = scalar_select %p175, %s176, %s177
      %p181 = pneg %p175
      %p182 = scmp.eq.s32.totalorder %s17, 7
      %p183 = por %p181, %p182
      %p184 = scmp.ne.s32.totalorder %s176, %s179
      %p185 = scmp.eq.s32.totalorder %s17, 0
      %p186 = por %p184, %p185
      %p187 = scmp.ne.s32.totalorder %s176, %s179
      %p188 = scmp.eq.s32.totalorder %s22, 7
      %p189 = por %p187, %p188
      %p190 = scmp.ne.s32.totalorder %s179, %s180
      %p191 = scmp.eq.s32.totalorder %s22, 0
      %p192 = por %p190, %p191
      %p193 = scmp.ne.s32.totalorder %s179, %s180
      %p194 = scmp.eq.s32.totalorder %s23, 7
      %p195 = por %p193, %p194
      %p197 = scmp.ne.s32.totalorder %s180, %s196
      %p198 = scmp.eq.s32.totalorder %s23, 0
      %p199 = por %p197, %p198
      %s201 = sadd.s32 %s200, 1
      %p204 = scmp.eq.s32.totalorder %s17, 7
      %p205 = scmp.ne.s32.totalorder %s200, %s202
      %p206 = scmp.eq.s32.totalorder %s17, 0
      %p207 = por %p205, %p206
      %p208 = scmp.ne.s32.totalorder %s200, %s202
      %p209 = scmp.eq.s32.totalorder %s22, 7
      %p210 = por %p208, %p209
      %p211 = scmp.ne.s32.totalorder %s202, %s203
      %p212 = scmp.eq.s32.totalorder %s22, 0
      %p213 = por %p211, %p212
      %p214 = scmp.ne.s32.totalorder %s202, %s203
      %p215 = scmp.eq.s32.totalorder %s23, 7
      %p216 = por %p214, %p215
      %p218 = scmp.ne.s32.totalorder %s203, %s217
      %p219 = scmp.eq.s32.totalorder %s23, 0
      %p220 = por %p218, %p219
      %s222 = sadd.s32 %s221, 1
      %p225 = scmp.eq.s32.totalorder %s17, 7
      %p226 = scmp.ne.s32.totalorder %s221, %s223
      %p227 = scmp.eq.s32.totalorder %s17, 0
      %p228 = por %p226, %p227
      %p229 = scmp.ne.s32.totalorder %s221, %s223
      %p230 = scmp.eq.s32.totalorder %s22, 7
      %p231 = por %p229, %p230
      %p232 = scmp.ne.s32.totalorder %s223, %s224
      %p233 = scmp.eq.s32.totalorder %s22, 0
      %p234 = por %p232, %p233
      %p235 = scmp.ne.s32.totalorder %s223, %s224
      %p236 = scmp.eq.s32.totalorder %s23, 7
      %p237 = por %p235, %p236
      %p239 = scmp.ne.s32.totalorder %s224, %s238
      %p240 = scmp.eq.s32.totalorder %s23, 0
      %p241 = por %p239, %p240
      %s242 = ssub.s32 %s24, %s43
      %s243 = ssub.s32 %s26, %s35
      %s244 = sor.u32 %s242, %s243
      %p245 = scmp.eq.s32.totalorder %s244, 0
      %s247 = sadd.s32 %s246, 1
      %s248 = scalar_select %p245, %s246, %s247
      %p251 = pneg %p245
      %p252 = scmp.eq.s32.totalorder %s17, 7
      %p253 = por %p251, %p252
      %p254 = scmp.ne.s32.totalorder %s246, %s249
      %p255 = scmp.eq.s32.totalorder %s17, 0
      %p256 = por %p254, %p255
      %p257 = scmp.ne.s32.totalorder %s246, %s249
      %p258 = scmp.eq.s32.totalorder %s22, 7
      %p259 = por %p257, %p258
      %p260 = scmp.ne.s32.totalorder %s249, %s250
      %p261 = scmp.eq.s32.totalorder %s22, 0
      %p262 = por %p260, %p261
      %p263 = scmp.ne.s32.totalorder %s249, %s250
      %p264 = scmp.eq.s32.totalorder %s23, 7
      %p265 = por %p263, %p264
      %p267 = scmp.ne.s32.totalorder %s250, %s266
      %p268 = scmp.eq.s32.totalorder %s23, 0
      %p269 = por %p267, %p268
      %s270 = ssub.s32 %s24, %s43
      %s271 = ssub.s32 %s25, %s39
      %s272 = sor.u32 %s270, %s271
      %p273 = scmp.eq.s32.totalorder %s272, 0
      %s275 = sadd.s32 %s274, 1
      %s276 = scalar_select %p273, %s274, %s275
      %p279 = pneg %p273
      %p280 = scmp.eq.s32.totalorder %s17, 7
      %p281 = por %p279, %p280
      %p282 = scmp.ne.s32.totalorder %s274, %s277
      %p283 = scmp.eq.s32.totalorder %s17, 0
      %p284 = por %p282, %p283
      %p285 = scmp.ne.s32.totalorder %s274, %s277
      %p286 = scmp.eq.s32.totalorder %s22, 7
      %p287 = por %p285, %p286
      %p288 = scmp.ne.s32.totalorder %s277, %s278
      %p289 = scmp.eq.s32.totalorder %s22, 0
      %p290 = por %p288, %p289
      %p291 = scmp.ne.s32.totalorder %s277, %s278
      %p292 = scmp.eq.s32.totalorder %s23, 7
      %p293 = por %p291, %p292
      %p295 = scmp.ne.s32.totalorder %s278, %s294
      %p296 = scmp.eq.s32.totalorder %s23, 0
      %p297 = por %p295, %p296
      %p298 = scmp.le.s32.totalorder 1, %s17
      %p299 = scmp.lt.s32.totalorder %s17, 9
      %p300 = pnand %p298, %p299
      %p301 = pneg %p300
      // Predicated region
      $region9: #{adaptive_mlp_forward.1} parent=5 // pred_check
        _
      $region10: #{adaptive_mlp_forward.1} parent=5 // pred_check_branch
        %303 = sbr.rel (%p300) target = $region12
      $region11: #{adaptive_mlp_forward.1} parent=5 // pred_region
        %s304 = ssub.s32 %s17, 1
        // Predicated region
        $region13: #{adaptive_mlp_forward.1} parent=11 // pred_check
          %p305 = pneg %p62
        $region14: #{adaptive_mlp_forward.1} parent=11 // pred_check_branch
          %307 = sbr.rel (%p305) target = $region16
        $region15: #{adaptive_mlp_forward.1} parent=11 // pred_region
          %p308 = scmp.lt.s32.totalorder %s28, 0
          %s309 = scalar_select %p308, %s28, 0
          %s310 = smul.addr %s309, 8
          %s311 = smul.addr %s310, 4
          %s312 = scalar_lea.vmem %s1, %s311
        $region16: #{adaptive_mlp_forward.1} parent=11 // pred_fallthru
          _
        // Predicated region
        $region17: #{adaptive_mlp_forward.1} parent=11 // pred_check
          %p313 = pneg %p83
        $region18: #{adaptive_mlp_forward.1} parent=11 // pred_check_branch
          %315 = sbr.rel (%p313) target = $region20
        $region19: #{adaptive_mlp_forward.1} parent=11 // pred_region
          %s317 = ssub.s32 8192, 8192
          %318 = vsyncadd [#allocation6], %s317
          %s319 = sshll.u32 [#allocation5], 4
          %s320 = int_to_ptr.vmem [resolvable:$true] %s319
          %325 = dma.hbm_to_vmem [thread:$0]  %s2, 8192, %s320, [#allocation6], 64, 64, 4
        $region20: #{adaptive_mlp_forward.1} parent=11 // pred_fallthru
          _
        // Predicated region
        $region21: #{adaptive_mlp_forward.1} parent=11 // pred_check
          %p326 = pneg %p104
        $region22: #{adaptive_mlp_forward.1} parent=11 // pred_check_branch
          %328 = sbr.rel (%p326) target = $region24
        $region23: #{adaptive_mlp_forward.1} parent=11 // pred_region
          _
        $region24: #{adaptive_mlp_forward.1} parent=11 // pred_fallthru
          _
        // Predicated region
        $region25: #{adaptive_mlp_forward.1} parent=11 // pred_check
          %p329 = pneg %p213
        $region26: #{adaptive_mlp_forward.1} parent=11 // pred_check_branch
          %331 = sbr.rel (%p329) target = $region28
        $region27: #{adaptive_mlp_forward.1} parent=11 // pred_region
          _
        $region28: #{adaptive_mlp_forward.1} parent=11 // pred_fallthru
          _
        // Predicated region
        $region29: #{adaptive_mlp_forward.1} parent=11 // pred_check
          %p332 = pneg %p234
        $region30: #{adaptive_mlp_forward.1} parent=11 // pred_check_branch
          %334 = sbr.rel (%p332) target = $region32
        $region31: #{adaptive_mlp_forward.1} parent=11 // pred_region
          _
        $region32: #{adaptive_mlp_forward.1} parent=11 // pred_fallthru
          _
      $region12: #{adaptive_mlp_forward.1} parent=5 // pred_fallthru
        _
      %p335 = scmp.lt.s32.totalorder %s17, 8
      // Predicated region
      $region33: #{adaptive_mlp_forward.1} parent=5 // pred_check
        %p336 = pneg %p335
      $region34: #{adaptive_mlp_forward.1} parent=5 // pred_check_branch
        %338 = sbr.rel (%p336) target = $region36
      $region35: #{adaptive_mlp_forward.1} parent=5 // pred_region
        // Predicated region
        $region37: #{adaptive_mlp_forward.1} parent=35 // pred_check
          %p339 = pneg %p142
        $region38: #{adaptive_mlp_forward.1} parent=35 // pred_check_branch
          %341 = sbr.rel (%p339) target = $region40
        $region39: #{adaptive_mlp_forward.1} parent=35 // pred_region
          %s342 = sld [smem:[#allocation4]]
          %s343 = ssub.s32 %s342, 1
          %p344 = scmp.lt.s32.totalorder %s26, %s343
          %s345 = scalar_select %p344, %s26, %s343
          %s346 = ssub.s32 %s345, 1
          %p347 = scmp.gt.s32.totalorder %s346, 0
          %s348 = scalar_select %p347, %s346, 0
          %p349 = scmp.lt.s32.totalorder %s348, 2
          %s350 = scalar_select %p349, %s348, 2
          %p351 = scmp.lt.s32.totalorder %s350, 2
          %s352 = scalar_select %p351, %s350, 2
          %s353 = smul.addr %s352, 16
          %s354 = smul.addr %s353, 4
          %s355 = scalar_lea.vmem %s4, %s354
          %s356 = sld [smem:[#allocation4]]
          %s357 = ssub.s32 %s356, 1
          %p358 = scmp.lt.s32.totalorder %s26, %s357
          %s359 = scalar_select %p358, %s26, %s357
          %s360 = ssub.s32 %s359, 1
          %p361 = scmp.gt.s32.totalorder %s360, 0
          %s362 = scalar_select %p361, %s360, 0
          %p363 = scmp.lt.s32.totalorder %s362, 2
          %s364 = scalar_select %p363, %s362, 2
        $region40: #{adaptive_mlp_forward.1} parent=35 // pred_fallthru
          _
        // Predicated region
        $region41: #{adaptive_mlp_forward.1} parent=35 // pred_check
          %p365 = pneg %p186
        $region42: #{adaptive_mlp_forward.1} parent=35 // pred_check_branch
          %367 = sbr.rel (%p365) target = $region44
        $region43: #{adaptive_mlp_forward.1} parent=35 // pred_region
          %s368 = sld [smem:[#allocation4]]
          %s369 = ssub.s32 %s368, 1
          %p370 = scmp.lt.s32.totalorder %s26, %s369
          %s371 = scalar_select %p370, %s26, %s369
          %s372 = ssub.s32 %s371, 1
          %p373 = scmp.gt.s32.totalorder %s372, 0
          %s374 = scalar_select %p373, %s372, 0
          %p375 = scmp.lt.s32.totalorder %s374, 2
          %s376 = scalar_select %p375, %s374, 2
          %p377 = scmp.lt.s32.totalorder %s376, 2
          %s378 = scalar_select %p377, %s376, 2
          %s379 = scalar_lea.vmem %s5, %s378
          %s380 = sld [smem:[#allocation4]]
          %s381 = ssub.s32 %s380, 1
          %p382 = scmp.lt.s32.totalorder %s26, %s381
          %s383 = scalar_select %p382, %s26, %s381
          %s384 = ssub.s32 %s383, 1
          %p385 = scmp.gt.s32.totalorder %s384, 0
          %s386 = scalar_select %p385, %s384, 0
          %p387 = scmp.lt.s32.totalorder %s386, 2
          %s388 = scalar_select %p387, %s386, 2
        $region44: #{adaptive_mlp_forward.1} parent=35 // pred_fallthru
          _
        // Predicated region
        $region45: #{adaptive_mlp_forward.1} parent=35 // pred_check
          %p389 = pneg %p256
        $region46: #{adaptive_mlp_forward.1} parent=35 // pred_check_branch
          %391 = sbr.rel (%p389) target = $region48
        $region47: #{adaptive_mlp_forward.1} parent=35 // pred_region
          %p392 = scmp.lt.s32.totalorder %s24, 1
          %s393 = scalar_select %p392, %s24, 1
          %p394 = scmp.lt.s32.totalorder %s26, 3
          %s395 = scalar_select %p394, %s26, 3
          %s396 = smul.addr %s393, 4
          %s397 = sadd.s32 %s395, %s396
          %s398 = scalar_lea.vmem %s8, %s397
        $region48: #{adaptive_mlp_forward.1} parent=35 // pred_fallthru
          _
      $region36: #{adaptive_mlp_forward.1} parent=5 // pred_fallthru
        _
      %p399 = scmp.le.s32.totalorder 1, %s17
      %p400 = scmp.lt.s32.totalorder %s17, 9
      %p401 = pnand %p399, %p400
      %p402 = pneg %p401
      // Predicated region
      $region49: #{adaptive_mlp_forward.1} parent=5 // pred_check
        _
      $region50: #{adaptive_mlp_forward.1} parent=5 // pred_check_branch
        %404 = sbr.rel (%p401) target = $region52
      $region51: #{adaptive_mlp_forward.1} parent=5 // pred_region
        %s405 = ssub.s32 %s17, 1
        // Predicated region
        $region53: #{adaptive_mlp_forward.1} parent=51 // pred_check
          %p406 = pneg %p83
        $region54: #{adaptive_mlp_forward.1} parent=51 // pred_check_branch
          %408 = sbr.rel (%p406) target = $region56
        $region55: #{adaptive_mlp_forward.1} parent=51 // pred_region
          %409 = dma.done [#allocation6], 8192
        $region56: #{adaptive_mlp_forward.1} parent=51 // pred_fallthru
          _
        %p410 = scmp.lt.s32.totalorder %s28, 0
        %s411 = scalar_select %p410, %s28, 0
        %s412 = smul.addr %s411, 8
        %s413 = smul.addr %s412, 4
        %s414 = scalar_lea.vmem %s1, %s413
        %p415 = pneg %p62
        %p416 = pneg %p59
        %p417 = pneg %p83
        %p418 = pneg %p80
        %p419 = pneg %p104
        %p420 = pneg %p101
        %s421 = sld [smem:[#allocation4]]
        %s422 = ssub.s32 %s421, 1
        %p423 = scmp.lt.s32.totalorder %s29, %s422
        %s424 = scalar_select %p423, %s29, %s422
        %s425 = ssub.s32 %s424, 1
        %p426 = scmp.gt.s32.totalorder %s425, 0
        %s427 = scalar_select %p426, %s425, 0
        %p428 = scmp.lt.s32.totalorder %s427, 2
        %s429 = scalar_select %p428, %s427, 2
        %p430 = scmp.lt.s32.totalorder %s429, 2
        %s431 = scalar_select %p430, %s429, 2
        %s432 = smul.addr %s431, 16
        %s433 = smul.addr %s432, 4
        %s434 = scalar_lea.vmem %s4, %s433
        %p435 = pneg %p148
        %p436 = pneg %p145
        %s437 = sld [smem:[#allocation4]]
        %s438 = ssub.s32 %s437, 1
        %p439 = scmp.lt.s32.totalorder %s29, %s438
        %s440 = scalar_select %p439, %s29, %s438
        %s441 = ssub.s32 %s440, 1
        %p442 = scmp.gt.s32.totalorder %s441, 0
        %s443 = scalar_select %p442, %s441, 0
        %p444 = scmp.lt.s32.totalorder %s443, 2
        %s445 = scalar_select %p444, %s443, 2
        %p446 = scmp.lt.s32.totalorder %s445, 2
        %s447 = scalar_select %p446, %s445, 2
        %s448 = scalar_lea.vmem %s5, %s447
        %p449 = pneg %p192
        %p450 = pneg %p189
        %p451 = pneg %p213
        %p452 = pneg %p210
        %p453 = pneg %p234
        %p454 = pneg %p231
        %p455 = scmp.lt.s32.totalorder %s27, 1
        %s456 = scalar_select %p455, %s27, 1
        %p457 = scmp.lt.s32.totalorder %s29, 3
        %s458 = scalar_select %p457, %s29, 3
        %s459 = smul.addr %s456, 4
        %s460 = sadd.s32 %s458, %s459
        %s461 = scalar_lea.vmem %s8, %s460
        %p462 = pneg %p262
        %p463 = pneg %p259
        %p464 = pneg %p290
        %p465 = pneg %p287
        %p466 = scmp.lt.s32.totalorder %s27, 1
        %s467 = scalar_select %p466, %s27, 1
        %p468 = scmp.lt.s32.totalorder %s28, 0
        %s469 = scalar_select %p468, %s28, 0
        %s470 = sadd.s32 %s469, %s467
        %s471 = smul.addr %s470, 8
        %s472 = scalar_lea.vmem %s9, %s471
        %p473 = scmp.lt.s32.totalorder %s28, 0
        %s474 = scalar_select %p473, %s28, 0
        %s475 = smul.addr %s474, 8
        %s476 = smul.addr %s475, 4
        %s477 = scalar_lea.vmem %s1, %s476
        %s478 = sld [smem:[#allocation4]]
        %s479 = ssub.s32 %s478, 1
        %p480 = scmp.lt.s32.totalorder %s29, %s479
        %s481 = scalar_select %p480, %s29, %s479
        %s482 = ssub.s32 %s481, 1
        %p483 = scmp.gt.s32.totalorder %s482, 0
        %s484 = scalar_select %p483, %s482, 0
        %p485 = scmp.lt.s32.totalorder %s484, 2
        %s486 = scalar_select %p485, %s484, 2
        %p487 = scmp.lt.s32.totalorder %s486, 2
        %s488 = scalar_select %p487, %s486, 2
        %s489 = smul.addr %s488, 16
        %s490 = smul.addr %s489, 4
        %s491 = scalar_lea.vmem %s4, %s490
        %s492 = sld [smem:[#allocation4]]
        %s493 = ssub.s32 %s492, 1
        %p494 = scmp.lt.s32.totalorder %s29, %s493
        %s495 = scalar_select %p494, %s29, %s493
        %s496 = ssub.s32 %s495, 1
        %p497 = scmp.gt.s32.totalorder %s496, 0
        %s498 = scalar_select %p497, %s496, 0
        %p499 = scmp.lt.s32.totalorder %s498, 2
        %s500 = scalar_select %p499, %s498, 2
        %s501 = sld [smem:[#allocation4]]
        %s502 = ssub.s32 %s501, 1
        %p503 = scmp.lt.s32.totalorder %s29, %s502
        %s504 = scalar_select %p503, %s29, %s502
        %s505 = ssub.s32 %s504, 1
        %p506 = scmp.gt.s32.totalorder %s505, 0
        %s507 = scalar_select %p506, %s505, 0
        %p508 = scmp.lt.s32.totalorder %s507, 2
        %s509 = scalar_select %p508, %s507, 2
        %p510 = scmp.lt.s32.totalorder %s509, 2
        %s511 = scalar_select %p510, %s509, 2
        %s512 = scalar_lea.vmem %s5, %s511
        %s513 = sld [smem:[#allocation4]]
        %s514 = ssub.s32 %s513, 1
        %p515 = scmp.lt.s32.totalorder %s29, %s514
        %s516 = scalar_select %p515, %s29, %s514
        %s517 = ssub.s32 %s516, 1
        %p518 = scmp.gt.s32.totalorder %s517, 0
        %s519 = scalar_select %p518, %s517, 0
        %p520 = scmp.lt.s32.totalorder %s519, 2
        %s521 = scalar_select %p520, %s519, 2
        %p522 = scmp.lt.s32.totalorder %s27, 1
        %s523 = scalar_select %p522, %s27, 1
        %p524 = scmp.lt.s32.totalorder %s29, 3
        %s525 = scalar_select %p524, %s29, 3
        %s526 = smul.addr %s523, 4
        %s527 = sadd.s32 %s525, %s526
        %s528 = scalar_lea.vmem %s8, %s527
        %p529 = scmp.lt.s32.totalorder %s27, 1
        %s530 = scalar_select %p529, %s27, 1
        %p531 = scmp.lt.s32.totalorder %s28, 0
        %s532 = scalar_select %p531, %s28, 0
        %s533 = sadd.s32 %s532, %s530
        %s534 = smul.addr %s533, 8
        %s535 = scalar_lea.vmem %s9, %s534
        %s537 = sld [smem:[#allocation4]]
        %v538 = vld [vmem:[%s528] sm:$0x1]
        %p539 = scmp.eq.s32.totalorder %s29, 0
        // Predicated region
        $region57: #{adaptive_mlp_forward.1} parent=51 // pred_check
          %p540 = pneg %p539
        $region58: #{adaptive_mlp_forward.1} parent=51 // pred_check_branch
          %542 = sbr.rel (%p540) target = $region60
        $region59: #{adaptive_mlp_forward.1} parent=51 // pred_region
          %v543 = vld [vmem:[%s477] sm:$0xff]
          %v544 = vld [vmem:[%s477 + $0x8] sm:$0xff]
          %v545 = vld [vmem:[%s477 + $0x10] sm:$0xff]
          %v546 = vld [vmem:[%s477 + $0x18] sm:$0xff]
          %v547 = vld [vmem:[#allocation5] sm:$0xf]
          %v548 = vld [vmem:[#allocation5 + $0x4] sm:$0xf]
          %v549 = vld [vmem:[#allocation5 + $0x8] sm:$0xf]
          %v550 = vld [vmem:[#allocation5 + $0xc] sm:$0xf]
          %v551 = vld [vmem:[#allocation5 + $0x10] sm:$0xf]
          %v552 = vld [vmem:[#allocation5 + $0x14] sm:$0xf]
          %v553 = vld [vmem:[#allocation5 + $0x18] sm:$0xf]
          %v554 = vld [vmem:[#allocation5 + $0x1c] sm:$0xf]
          %v555 = vld [vmem:[#allocation5 + $0x20] sm:$0xf]
          %v556 = vld [vmem:[#allocation5 + $0x24] sm:$0xf]
          %v557 = vld [vmem:[#allocation5 + $0x28] sm:$0xf]
          %v558 = vld [vmem:[#allocation5 + $0x2c] sm:$0xf]
          %v559 = vld [vmem:[#allocation5 + $0x30] sm:$0xf]
          %v560 = vld [vmem:[#allocation5 + $0x34] sm:$0xf]
          %v561 = vld [vmem:[#allocation5 + $0x38] sm:$0xf]
          %v562 = vld [vmem:[#allocation5 + $0x3c] sm:$0xf]
          %v563 = vld [vmem:[#allocation5 + $0x40] sm:$0xf]
          %v564 = vld [vmem:[#allocation5 + $0x44] sm:$0xf]
          %v565 = vld [vmem:[#allocation5 + $0x48] sm:$0xf]
          %v566 = vld [vmem:[#allocation5 + $0x4c] sm:$0xf]
          %v567 = vld [vmem:[#allocation5 + $0x50] sm:$0xf]
          %v568 = vld [vmem:[#allocation5 + $0x54] sm:$0xf]
          %v569 = vld [vmem:[#allocation5 + $0x58] sm:$0xf]
          %v570 = vld [vmem:[#allocation5 + $0x5c] sm:$0xf]
          %v571 = vld [vmem:[#allocation5 + $0x60] sm:$0xf]
          %v572 = vld [vmem:[#allocation5 + $0x64] sm:$0xf]
          %v573 = vld [vmem:[#allocation5 + $0x68] sm:$0xf]
          %v574 = vld [vmem:[#allocation5 + $0x6c] sm:$0xf]
          %v575 = vld [vmem:[#allocation5 + $0x70] sm:$0xf]
          %v576 = vld [vmem:[#allocation5 + $0x74] sm:$0xf]
          %v577 = vld [vmem:[#allocation5 + $0x78] sm:$0xf]
          %v578 = vld [vmem:[#allocation5 + $0x7c] sm:$0xf]
          %v579 = vld [vmem:[#allocation5 + $0x80] sm:$0xf]
          %v580 = vld [vmem:[#allocation5 + $0x84] sm:$0xf]
          %v581 = vld [vmem:[#allocation5 + $0x88] sm:$0xf]
          %v582 = vld [vmem:[#allocation5 + $0x8c] sm:$0xf]
          %v583 = vld [vmem:[#allocation5 + $0x90] sm:$0xf]
          %v584 = vld [vmem:[#allocation5 + $0x94] sm:$0xf]
          %v585 = vld [vmem:[#allocation5 + $0x98] sm:$0xf]
          %v586 = vld [vmem:[#allocation5 + $0x9c] sm:$0xf]
          %v587 = vld [vmem:[#allocation5 + $0xa0] sm:$0xf]
          %v588 = vld [vmem:[#allocation5 + $0xa4] sm:$0xf]
          %v589 = vld [vmem:[#allocation5 + $0xa8] sm:$0xf]
          %v590 = vld [vmem:[#allocation5 + $0xac] sm:$0xf]
          %v591 = vld [vmem:[#allocation5 + $0xb0] sm:$0xf]
          %v592 = vld [vmem:[#allocation5 + $0xb4] sm:$0xf]
          %v593 = vld [vmem:[#allocation5 + $0xb8] sm:$0xf]
          %v594 = vld [vmem:[#allocation5 + $0xbc] sm:$0xf]
          %v595 = vld [vmem:[#allocation5 + $0xc0] sm:$0xf]
          %v596 = vld [vmem:[#allocation5 + $0xc4] sm:$0xf]
          %v597 = vld [vmem:[#allocation5 + $0xc8] sm:$0xf]
          %v598 = vld [vmem:[#allocation5 + $0xcc] sm:$0xf]
          %v599 = vld [vmem:[#allocation5 + $0xd0] sm:$0xf]
          %v600 = vld [vmem:[#allocation5 + $0xd4] sm:$0xf]
          %v601 = vld [vmem:[#allocation5 + $0xd8] sm:$0xf]
          %v602 = vld [vmem:[#allocation5 + $0xdc] sm:$0xf]
          %v603 = vld [vmem:[#allocation5 + $0xe0] sm:$0xf]
          %v604 = vld [vmem:[#allocation5 + $0xe4] sm:$0xf]
          %v605 = vld [vmem:[#allocation5 + $0xe8] sm:$0xf]
          %v606 = vld [vmem:[#allocation5 + $0xec] sm:$0xf]
          %v607 = vld [vmem:[#allocation5 + $0xf0] sm:$0xf]
          %v608 = vld [vmem:[#allocation5 + $0xf4] sm:$0xf]
          %v609 = vld [vmem:[#allocation5 + $0xf8] sm:$0xf]
          %v610 = vld [vmem:[#allocation5 + $0xfc] sm:$0xf]
          %v611 = vld [vmem:[#allocation5 + $0x100] sm:$0xf]
          %v612 = vld [vmem:[#allocation5 + $0x104] sm:$0xf]
          %v613 = vld [vmem:[#allocation5 + $0x108] sm:$0xf]
          %v614 = vld [vmem:[#allocation5 + $0x10c] sm:$0xf]
          %v615 = vld [vmem:[#allocation5 + $0x110] sm:$0xf]
          %v616 = vld [vmem:[#allocation5 + $0x114] sm:$0xf]
          %v617 = vld [vmem:[#allocation5 + $0x118] sm:$0xf]
          %v618 = vld [vmem:[#allocation5 + $0x11c] sm:$0xf]
          %v619 = vld [vmem:[#allocation5 + $0x120] sm:$0xf]
          %v620 = vld [vmem:[#allocation5 + $0x124] sm:$0xf]
          %v621 = vld [vmem:[#allocation5 + $0x128] sm:$0xf]
          %v622 = vld [vmem:[#allocation5 + $0x12c] sm:$0xf]
          %v623 = vld [vmem:[#allocation5 + $0x130] sm:$0xf]
          %v624 = vld [vmem:[#allocation5 + $0x134] sm:$0xf]
          %v625 = vld [vmem:[#allocation5 + $0x138] sm:$0xf]
          %v626 = vld [vmem:[#allocation5 + $0x13c] sm:$0xf]
          %v627 = vld [vmem:[#allocation5 + $0x140] sm:$0xf]
          %v628 = vld [vmem:[#allocation5 + $0x144] sm:$0xf]
          %v629 = vld [vmem:[#allocation5 + $0x148] sm:$0xf]
          %v630 = vld [vmem:[#allocation5 + $0x14c] sm:$0xf]
          %v631 = vld [vmem:[#allocation5 + $0x150] sm:$0xf]
          %v632 = vld [vmem:[#allocation5 + $0x154] sm:$0xf]
          %v633 = vld [vmem:[#allocation5 + $0x158] sm:$0xf]
          %v634 = vld [vmem:[#allocation5 + $0x15c] sm:$0xf]
          %v635 = vld [vmem:[#allocation5 + $0x160] sm:$0xf]
          %v636 = vld [vmem:[#allocation5 + $0x164] sm:$0xf]
          %v637 = vld [vmem:[#allocation5 + $0x168] sm:$0xf]
          %v638 = vld [vmem:[#allocation5 + $0x16c] sm:$0xf]
          %v639 = vld [vmem:[#allocation5 + $0x170] sm:$0xf]
          %v640 = vld [vmem:[#allocation5 + $0x174] sm:$0xf]
          %v641 = vld [vmem:[#allocation5 + $0x178] sm:$0xf]
          %v642 = vld [vmem:[#allocation5 + $0x17c] sm:$0xf]
          %v643 = vld [vmem:[#allocation5 + $0x180] sm:$0xf]
          %v644 = vld [vmem:[#allocation5 + $0x184] sm:$0xf]
          %v645 = vld [vmem:[#allocation5 + $0x188] sm:$0xf]
          %v646 = vld [vmem:[#allocation5 + $0x18c] sm:$0xf]
          %v647 = vld [vmem:[#allocation5 + $0x190] sm:$0xf]
          %v648 = vld [vmem:[#allocation5 + $0x194] sm:$0xf]
          %v649 = vld [vmem:[#allocation5 + $0x198] sm:$0xf]
          %v650 = vld [vmem:[#allocation5 + $0x19c] sm:$0xf]
          %v651 = vld [vmem:[#allocation5 + $0x1a0] sm:$0xf]
          %v652 = vld [vmem:[#allocation5 + $0x1a4] sm:$0xf]
          %v653 = vld [vmem:[#allocation5 + $0x1a8] sm:$0xf]
          %v654 = vld [vmem:[#allocation5 + $0x1ac] sm:$0xf]
          %v655 = vld [vmem:[#allocation5 + $0x1b0] sm:$0xf]
          %v656 = vld [vmem:[#allocation5 + $0x1b4] sm:$0xf]
          %v657 = vld [vmem:[#allocation5 + $0x1b8] sm:$0xf]
          %v658 = vld [vmem:[#allocation5 + $0x1bc] sm:$0xf]
          %v659 = vld [vmem:[#allocation5 + $0x1c0] sm:$0xf]
          %v660 = vld [vmem:[#allocation5 + $0x1c4] sm:$0xf]
          %v661 = vld [vmem:[#allocation5 + $0x1c8] sm:$0xf]
          %v662 = vld [vmem:[#allocation5 + $0x1cc] sm:$0xf]
          %v663 = vld [vmem:[#allocation5 + $0x1d0] sm:$0xf]
          %v664 = vld [vmem:[#allocation5 + $0x1d4] sm:$0xf]
          %v665 = vld [vmem:[#allocation5 + $0x1d8] sm:$0xf]
          %v666 = vld [vmem:[#allocation5 + $0x1dc] sm:$0xf]
          %v667 = vld [vmem:[#allocation5 + $0x1e0] sm:$0xf]
          %v668 = vld [vmem:[#allocation5 + $0x1e4] sm:$0xf]
          %v669 = vld [vmem:[#allocation5 + $0x1e8] sm:$0xf]
          %v670 = vld [vmem:[#allocation5 + $0x1ec] sm:$0xf]
          %v671 = vld [vmem:[#allocation5 + $0x1f0] sm:$0xf]
          %v672 = vld [vmem:[#allocation5 + $0x1f4] sm:$0xf]
          %v673 = vld [vmem:[#allocation5 + $0x1f8] sm:$0xf]
          %v674 = vld [vmem:[#allocation5 + $0x1fc] sm:$0xf]
          %v675 = vld [vmem:[%s3] sm:$0x1]
          %v677 = vlaneseq
          %v678 = vshrl.u32 %v677, 7
          %v679 = vsub.s32 0, %v678
          %v680 = vrot.slane %v675, %v679
          %v686 = vunpack.c.l.b16 %v543
          %v687 = vunpack.c.h.b16 %v543
          %v688 = vunpack.c.l.b16 %v544
          %v689 = vunpack.c.h.b16 %v544
          %v690 = vunpack.c.l.b16 %v545
          %v691 = vunpack.c.h.b16 %v545
          %v692 = vunpack.c.l.b16 %v546
          %v693 = vunpack.c.h.b16 %v546
          %v694 = vpack.c.b16 %v686, %v686
          %v695 = vpack.c.b16 %v687, %v687
          %v696 = vpack.c.b16 %v688, %v688
          %v697 = vpack.c.b16 %v689, %v689
          %v698 = vpack.c.b16 %v690, %v690
          %v699 = vpack.c.b16 %v691, %v691
          %v700 = vpack.c.b16 %v692, %v692
          %v701 = vpack.c.b16 %v693, %v693
          %v838 = vunpack.c.l.b16 %v547
          %v839 = vunpack.c.l.b16 %v548
          %v840 = vunpack.c.l.b16 %v549
          %v841 = vunpack.c.l.b16 %v550
          %v842 = vunpack.c.l.b16 %v551
          %v843 = vunpack.c.l.b16 %v552
          %v844 = vunpack.c.l.b16 %v553
          %v845 = vunpack.c.l.b16 %v554
          %v846 = vunpack.c.l.b16 %v555
          %v847 = vunpack.c.l.b16 %v556
          %v848 = vunpack.c.l.b16 %v557
          %v849 = vunpack.c.l.b16 %v558
          %v850 = vunpack.c.l.b16 %v559
          %v851 = vunpack.c.l.b16 %v560
          %v852 = vunpack.c.l.b16 %v561
          %v853 = vunpack.c.l.b16 %v562
          %v854 = vunpack.c.l.b16 %v563
          %v855 = vunpack.c.l.b16 %v564
          %v856 = vunpack.c.l.b16 %v565
          %v857 = vunpack.c.l.b16 %v566
          %v858 = vunpack.c.l.b16 %v567
          %v859 = vunpack.c.l.b16 %v568
          %v860 = vunpack.c.l.b16 %v569
          %v861 = vunpack.c.l.b16 %v570
          %v862 = vunpack.c.l.b16 %v571
          %v863 = vunpack.c.l.b16 %v572
          %v864 = vunpack.c.l.b16 %v573
          %v865 = vunpack.c.l.b16 %v574
          %v866 = vunpack.c.l.b16 %v575
          %v867 = vunpack.c.l.b16 %v576
          %v868 = vunpack.c.l.b16 %v577
          %v869 = vunpack.c.l.b16 %v578
          %v870 = vunpack.c.l.b16 %v579
          %v871 = vunpack.c.l.b16 %v580
          %v872 = vunpack.c.l.b16 %v581
          %v873 = vunpack.c.l.b16 %v582
          %v874 = vunpack.c.l.b16 %v583
          %v875 = vunpack.c.l.b16 %v584
          %v876 = vunpack.c.l.b16 %v585
          %v877 = vunpack.c.l.b16 %v586
          %v878 = vunpack.c.l.b16 %v587
          %v879 = vunpack.c.l.b16 %v588
          %v880 = vunpack.c.l.b16 %v589
          %v881 = vunpack.c.l.b16 %v590
          %v882 = vunpack.c.l.b16 %v591
          %v883 = vunpack.c.l.b16 %v592
          %v884 = vunpack.c.l.b16 %v593
          %v885 = vunpack.c.l.b16 %v594
          %v886 = vunpack.c.l.b16 %v595
          %v887 = vunpack.c.l.b16 %v596
          %v888 = vunpack.c.l.b16 %v597
          %v889 = vunpack.c.l.b16 %v598
          %v890 = vunpack.c.l.b16 %v599
          %v891 = vunpack.c.l.b16 %v600
          %v892 = vunpack.c.l.b16 %v601
          %v893 = vunpack.c.l.b16 %v602
          %v894 = vunpack.c.l.b16 %v603
          %v895 = vunpack.c.l.b16 %v604
          %v896 = vunpack.c.l.b16 %v605
          %v897 = vunpack.c.l.b16 %v606
          %v898 = vunpack.c.l.b16 %v607
          %v899 = vunpack.c.l.b16 %v608
          %v900 = vunpack.c.l.b16 %v609
          %v901 = vunpack.c.l.b16 %v610
          %v902 = vunpack.c.l.b16 %v611
          %v903 = vunpack.c.l.b16 %v612
          %v904 = vunpack.c.l.b16 %v613
          %v905 = vunpack.c.l.b16 %v614
          %v906 = vunpack.c.l.b16 %v615
          %v907 = vunpack.c.l.b16 %v616
          %v908 = vunpack.c.l.b16 %v617
          %v909 = vunpack.c.l.b16 %v618
          %v910 = vunpack.c.l.b16 %v619
          %v911 = vunpack.c.l.b16 %v620
          %v912 = vunpack.c.l.b16 %v621
          %v913 = vunpack.c.l.b16 %v622
          %v914 = vunpack.c.l.b16 %v623
          %v915 = vunpack.c.l.b16 %v624
          %v916 = vunpack.c.l.b16 %v625
          %v917 = vunpack.c.l.b16 %v626
          %v918 = vunpack.c.l.b16 %v627
          %v919 = vunpack.c.l.b16 %v628
          %v920 = vunpack.c.l.b16 %v629
          %v921 = vunpack.c.l.b16 %v630
          %v922 = vunpack.c.l.b16 %v631
          %v923 = vunpack.c.l.b16 %v632
          %v924 = vunpack.c.l.b16 %v633
          %v925 = vunpack.c.l.b16 %v634
          %v926 = vunpack.c.l.b16 %v635
          %v927 = vunpack.c.l.b16 %v636
          %v928 = vunpack.c.l.b16 %v637
          %v929 = vunpack.c.l.b16 %v638
          %v930 = vunpack.c.l.b16 %v639
          %v931 = vunpack.c.l.b16 %v640
          %v932 = vunpack.c.l.b16 %v641
          %v933 = vunpack.c.l.b16 %v642
          %v934 = vunpack.c.l.b16 %v643
          %v935 = vunpack.c.l.b16 %v644
          %v936 = vunpack.c.l.b16 %v645
          %v937 = vunpack.c.l.b16 %v646
          %v938 = vunpack.c.l.b16 %v647
          %v939 = vunpack.c.l.b16 %v648
          %v940 = vunpack.c.l.b16 %v649
          %v941 = vunpack.c.l.b16 %v650
          %v942 = vunpack.c.l.b16 %v651
          %v943 = vunpack.c.l.b16 %v652
          %v944 = vunpack.c.l.b16 %v653
          %v945 = vunpack.c.l.b16 %v654
          %v946 = vunpack.c.l.b16 %v655
          %v947 = vunpack.c.l.b16 %v656
          %v948 = vunpack.c.l.b16 %v657
          %v949 = vunpack.c.l.b16 %v658
          %v950 = vunpack.c.l.b16 %v659
          %v951 = vunpack.c.l.b16 %v660
          %v952 = vunpack.c.l.b16 %v661
          %v953 = vunpack.c.l.b16 %v662
          %v954 = vunpack.c.l.b16 %v663
          %v955 = vunpack.c.l.b16 %v664
          %v956 = vunpack.c.l.b16 %v665
          %v957 = vunpack.c.l.b16 %v666
          %v958 = vunpack.c.l.b16 %v667
          %v959 = vunpack.c.l.b16 %v668
          %v960 = vunpack.c.l.b16 %v669
          %v961 = vunpack.c.l.b16 %v670
          %v962 = vunpack.c.l.b16 %v671
          %v963 = vunpack.c.l.b16 %v672
          %v964 = vunpack.c.l.b16 %v673
          %v965 = vunpack.c.l.b16 %v674
          %v966 = vpack.c.b16 %v839, %v838
          %v967 = vpack.c.b16 %v841, %v840
          %v968 = vpack.c.b16 %v843, %v842
          %v969 = vpack.c.b16 %v845, %v844
          %v970 = vpack.c.b16 %v847, %v846
          %v971 = vpack.c.b16 %v849, %v848
          %v972 = vpack.c.b16 %v851, %v850
          %v973 = vpack.c.b16 %v853, %v852
          %v974 = vpack.c.b16 %v855, %v854
          %v975 = vpack.c.b16 %v857, %v856
          %v976 = vpack.c.b16 %v859, %v858
          %v977 = vpack.c.b16 %v861, %v860
          %v978 = vpack.c.b16 %v863, %v862
          %v979 = vpack.c.b16 %v865, %v864
          %v980 = vpack.c.b16 %v867, %v866
          %v981 = vpack.c.b16 %v869, %v868
          %v982 = vpack.c.b16 %v871, %v870
          %v983 = vpack.c.b16 %v873, %v872
          %v984 = vpack.c.b16 %v875, %v874
          %v985 = vpack.c.b16 %v877, %v876
          %v986 = vpack.c.b16 %v879, %v878
          %v987 = vpack.c.b16 %v881, %v880
          %v988 = vpack.c.b16 %v883, %v882
          %v989 = vpack.c.b16 %v885, %v884
          %v990 = vpack.c.b16 %v887, %v886
          %v991 = vpack.c.b16 %v889, %v888
          %v992 = vpack.c.b16 %v891, %v890
          %v993 = vpack.c.b16 %v893, %v892
          %v994 = vpack.c.b16 %v895, %v894
          %v995 = vpack.c.b16 %v897, %v896
          %v996 = vpack.c.b16 %v899, %v898
          %v997 = vpack.c.b16 %v901, %v900
          %v998 = vpack.c.b16 %v903, %v902
          %v999 = vpack.c.b16 %v905, %v904
          %v1000 = vpack.c.b16 %v907, %v906
          %v1001 = vpack.c.b16 %v909, %v908
          %v1002 = vpack.c.b16 %v911, %v910
          %v1003 = vpack.c.b16 %v913, %v912
          %v1004 = vpack.c.b16 %v915, %v914
          %v1005 = vpack.c.b16 %v917, %v916
          %v1006 = vpack.c.b16 %v919, %v918
          %v1007 = vpack.c.b16 %v921, %v920
          %v1008 = vpack.c.b16 %v923, %v922
          %v1009 = vpack.c.b16 %v925, %v924
          %v1010 = vpack.c.b16 %v927, %v926
          %v1011 = vpack.c.b16 %v929, %v928
          %v1012 = vpack.c.b16 %v931, %v930
          %v1013 = vpack.c.b16 %v933, %v932
          %v1014 = vpack.c.b16 %v935, %v934
          %v1015 = vpack.c.b16 %v937, %v936
          %v1016 = vpack.c.b16 %v939, %v938
          %v1017 = vpack.c.b16 %v941, %v940
          %v1018 = vpack.c.b16 %v943, %v942
          %v1019 = vpack.c.b16 %v945, %v944
          %v1020 = vpack.c.b16 %v947, %v946
          %v1021 = vpack.c.b16 %v949, %v948
          %v1022 = vpack.c.b16 %v951, %v950
          %v1023 = vpack.c.b16 %v953, %v952
          %v1024 = vpack.c.b16 %v955, %v954
          %v1025 = vpack.c.b16 %v957, %v956
          %v1026 = vpack.c.b16 %v959, %v958
          %v1027 = vpack.c.b16 %v961, %v960
          %v1028 = vpack.c.b16 %v963, %v962
          %v1029 = vpack.c.b16 %v965, %v964
          %1094 = vmatprep.subr.bf16.mxu0 0
          %1095 = vmatpush1.bf16.msra.mxu0 %v973
          %1096 = vmatprep.subr.bf16.mxu0 0
          %1097 = vmatpush1.bf16.msra.mxu0 %v972
          %1098 = vmatprep.subr.bf16.mxu0 0
          %1099 = vmatpush1.bf16.msra.mxu0 %v971
          %1100 = vmatprep.subr.bf16.mxu0 0
          %1101 = vmatpush1.bf16.msra.mxu0 %v970
          %1102 = vmatprep.subr.bf16.mxu0 0
          %1103 = vmatpush1.bf16.msra.mxu0 %v969
          %1104 = vmatprep.subr.bf16.mxu0 0
          %1105 = vmatpush1.bf16.msra.mxu0 %v968
          %1106 = vmatprep.subr.bf16.mxu0 0
          %1107 = vmatpush1.bf16.msra.mxu0 %v967
          %1108 = vmatprep.subr.bf16.mxu0 0
          %1109 = vmatpush1.bf16.msra.mxu0 %v966
          %1110 = vmatprep.subr.bf16.mxu0 0
          %1111 = vmatpush2.bf16.msra.mxu0 %v981
          %1112 = vmatprep.subr.bf16.mxu0 0
          %1113 = vmatpush2.bf16.msra.mxu0 %v980
          %1114 = vmatprep.subr.bf16.mxu0 0
          %1115 = vmatpush2.bf16.msra.mxu0 %v979
          %1116 = vmatprep.subr.bf16.mxu0 0
          %1117 = vmatpush2.bf16.msra.mxu0 %v978
          %1118 = vmatprep.subr.bf16.mxu0 0
          %1119 = vmatpush2.bf16.msra.mxu0 %v977
          %1120 = vmatprep.subr.bf16.mxu0 0
          %1121 = vmatpush2.bf16.msra.mxu0 %v976
          %1122 = vmatprep.subr.bf16.mxu0 0
          %1123 = vmatpush2.bf16.msra.mxu0 %v975
          %1124 = vmatprep.subr.bf16.mxu0 0
          %1125 = vmatpush2.bf16.msra.mxu0 %v974
          %1126 = vmatprep.mubr.bf16.mxu0 %v695
          %1127 = vmatmul.mubr.bf16.gmra.mxu0 %v694
          %v1128 = vpop.f32.mrf.mxu0
          %v1129 = vadd.f32 %v680, %v1128
          %v1130 = vpop.f32.mrf.mxu0
          %v1131 = vpop.f32.mrf.mxu0
          %v1132 = vpop.f32.mrf.mxu0
          %1133 = vdwg.mxu0
          %1134 = vmatprep.subr.bf16.mxu0 0
          %1135 = vmatpush1.bf16.msra.mxu0 %v989
          %1136 = vmatprep.subr.bf16.mxu0 0
          %1137 = vmatpush1.bf16.msra.mxu0 %v988
          %1138 = vmatprep.subr.bf16.mxu0 0
          %1139 = vmatpush1.bf16.msra.mxu0 %v987
          %1140 = vmatprep.subr.bf16.mxu0 0
          %1141 = vmatpush1.bf16.msra.mxu0 %v986
          %1142 = vmatprep.subr.bf16.mxu0 0
          %1143 = vmatpush1.bf16.msra.mxu0 %v985
          %1144 = vmatprep.subr.bf16.mxu0 0
          %1145 = vmatpush1.bf16.msra.mxu0 %v984
          %1146 = vmatprep.subr.bf16.mxu0 0
          %1147 = vmatpush1.bf16.msra.mxu0 %v983
          %1148 = vmatprep.subr.bf16.mxu0 0
          %1149 = vmatpush1.bf16.msra.mxu0 %v982
          %1150 = vmatprep.subr.bf16.mxu0 0
          %1151 = vmatpush2.bf16.msra.mxu0 %v997
          %1152 = vmatprep.subr.bf16.mxu0 0
          %1153 = vmatpush2.bf16.msra.mxu0 %v996
          %1154 = vmatprep.subr.bf16.mxu0 0
          %1155 = vmatpush2.bf16.msra.mxu0 %v995
          %1156 = vmatprep.subr.bf16.mxu0 0
          %1157 = vmatpush2.bf16.msra.mxu0 %v994
          %1158 = vmatprep.subr.bf16.mxu0 0
          %1159 = vmatpush2.bf16.msra.mxu0 %v993
          %1160 = vmatprep.subr.bf16.mxu0 0
          %1161 = vmatpush2.bf16.msra.mxu0 %v992
          %1162 = vmatprep.subr.bf16.mxu0 0
          %1163 = vmatpush2.bf16.msra.mxu0 %v991
          %1164 = vmatprep.subr.bf16.mxu0 0
          %1165 = vmatpush2.bf16.msra.mxu0 %v990
          %1166 = vmatprep.mubr.bf16.mxu0 %v697
          %1167 = vmatmul.mubr.bf16.gmra.mxu0 %v696
          %v1168 = vpop.f32.mrf.mxu0
          %v1169 = vadd.f32 %v1129, %v1168
          %v1170 = vpop.f32.mrf.mxu0
          %v1171 = vpop.f32.mrf.mxu0
          %v1172 = vpop.f32.mrf.mxu0
          %1173 = vdwg.mxu0
          %1174 = vmatprep.subr.bf16.mxu0 0
          %1175 = vmatpush1.bf16.msra.mxu0 %v1005
          %1176 = vmatprep.subr.bf16.mxu0 0
          %1177 = vmatpush1.bf16.msra.mxu0 %v1004
          %1178 = vmatprep.subr.bf16.mxu0 0
          %1179 = vmatpush1.bf16.msra.mxu0 %v1003
          %1180 = vmatprep.subr.bf16.mxu0 0
          %1181 = vmatpush1.bf16.msra.mxu0 %v1002
          %1182 = vmatprep.subr.bf16.mxu0 0
          %1183 = vmatpush1.bf16.msra.mxu0 %v1001
          %1184 = vmatprep.subr.bf16.mxu0 0
          %1185 = vmatpush1.bf16.msra.mxu0 %v1000
          %1186 = vmatprep.subr.bf16.mxu0 0
          %1187 = vmatpush1.bf16.msra.mxu0 %v999
          %1188 = vmatprep.subr.bf16.mxu0 0
          %1189 = vmatpush1.bf16.msra.mxu0 %v998
          %1190 = vmatprep.subr.bf16.mxu0 0
          %1191 = vmatpush2.bf16.msra.mxu0 %v1013
          %1192 = vmatprep.subr.bf16.mxu0 0
          %1193 = vmatpush2.bf16.msra.mxu0 %v1012
          %1194 = vmatprep.subr.bf16.mxu0 0
          %1195 = vmatpush2.bf16.msra.mxu0 %v1011
          %1196 = vmatprep.subr.bf16.mxu0 0
          %1197 = vmatpush2.bf16.msra.mxu0 %v1010
          %1198 = vmatprep.subr.bf16.mxu0 0
          %1199 = vmatpush2.bf16.msra.mxu0 %v1009
          %1200 = vmatprep.subr.bf16.mxu0 0
          %1201 = vmatpush2.bf16.msra.mxu0 %v1008
          %1202 = vmatprep.subr.bf16.mxu0 0
          %1203 = vmatpush2.bf16.msra.mxu0 %v1007
          %1204 = vmatprep.subr.bf16.mxu0 0
          %1205 = vmatpush2.bf16.msra.mxu0 %v1006
          %1206 = vmatprep.mubr.bf16.mxu0 %v699
          %1207 = vmatmul.mubr.bf16.gmra.mxu0 %v698
          %v1208 = vpop.f32.mrf.mxu0
          %v1209 = vadd.f32 %v1169, %v1208
          %v1210 = vpop.f32.mrf.mxu0
          %v1211 = vpop.f32.mrf.mxu0
          %v1212 = vpop.f32.mrf.mxu0
          %1213 = vdwg.mxu0
          %1214 = vmatprep.subr.bf16.mxu0 0
          %1215 = vmatpush1.bf16.msra.mxu0 %v1021
          %1216 = vmatprep.subr.bf16.mxu0 0
          %1217 = vmatpush1.bf16.msra.mxu0 %v1020
          %1218 = vmatprep.subr.bf16.mxu0 0
          %1219 = vmatpush1.bf16.msra.mxu0 %v1019
          %1220 = vmatprep.subr.bf16.mxu0 0
          %1221 = vmatpush1.bf16.msra.mxu0 %v1018
          %1222 = vmatprep.subr.bf16.mxu0 0
          %1223 = vmatpush1.bf16.msra.mxu0 %v1017
          %1224 = vmatprep.subr.bf16.mxu0 0
          %1225 = vmatpush1.bf16.msra.mxu0 %v1016
          %1226 = vmatprep.subr.bf16.mxu0 0
          %1227 = vmatpush1.bf16.msra.mxu0 %v1015
          %1228 = vmatprep.subr.bf16.mxu0 0
          %1229 = vmatpush1.bf16.msra.mxu0 %v1014
          %1230 = vmatprep.subr.bf16.mxu0 0
          %1231 = vmatpush2.bf16.msra.mxu0 %v1029
          %1232 = vmatprep.subr.bf16.mxu0 0
          %1233 = vmatpush2.bf16.msra.mxu0 %v1028
          %1234 = vmatprep.subr.bf16.mxu0 0
          %1235 = vmatpush2.bf16.msra.mxu0 %v1027
          %1236 = vmatprep.subr.bf16.mxu0 0
          %1237 = vmatpush2.bf16.msra.mxu0 %v1026
          %1238 = vmatprep.subr.bf16.mxu0 0
          %1239 = vmatpush2.bf16.msra.mxu0 %v1025
          %1240 = vmatprep.subr.bf16.mxu0 0
          %1241 = vmatpush2.bf16.msra.mxu0 %v1024
          %1242 = vmatprep.subr.bf16.mxu0 0
          %1243 = vmatpush2.bf16.msra.mxu0 %v1023
          %1244 = vmatprep.subr.bf16.mxu0 0
          %1245 = vmatpush2.bf16.msra.mxu0 %v1022
          %1246 = vmatprep.mubr.bf16.mxu0 %v701
          %1247 = vmatmul.mubr.bf16.gmra.mxu0 %v700
          %v1248 = vpop.f32.mrf.mxu0
          %v1249 = vadd.f32 %v1209, %v1248
          %v1250 = vpop.f32.mrf.mxu0
          %v1251 = vpop.f32.mrf.mxu0
          %v1252 = vpop.f32.mrf.mxu0
          %1253 = vdwg.mxu0
          %v1254 = vmax.f32 %v1249, 0.0
          %v1256 = vlaneseq
          %v1257 = vshrl.u32 %v1256, 7
          %v1258 = vsub.s32 0, %v1257
          %v1259 = vrot.slane %v538, %v1258
          %v1261 = vmul.f32 %v1254, %v1259
          %1262 = vst [vmem:[#allocation2] sm:$0xff] %v1261
        $region60: #{adaptive_mlp_forward.1} parent=51 // pred_fallthru
          _
        %p1263 = scmp.gt.s32.totalorder %s29, 0
        %p1264 = scmp.lt.s32.totalorder %s29, %s537
        %p1265 = pnand %p1263, %p1264
        %p1266 = pneg %p1265
        // Predicated region
        $region61: #{adaptive_mlp_forward.1} parent=51 // pred_check
          _
        $region62: #{adaptive_mlp_forward.1} parent=51 // pred_check_branch
          %1268 = sbr.rel (%p1265) target = $region64
        $region63: #{adaptive_mlp_forward.1} parent=51 // pred_region
          %v1269 = vld [vmem:[#allocation2] sm:$0xff]
          %v1270 = vpack.c.bf16 %v1269, %v1269
          %v1271 = vld [vmem:[%s491] sm:$0xf]
          %v1272 = vld [vmem:[%s491 + $0x4] sm:$0xf]
          %v1273 = vld [vmem:[%s491 + $0x8] sm:$0xf]
          %v1274 = vld [vmem:[%s491 + $0xc] sm:$0xf]
          %v1275 = vld [vmem:[%s491 + $0x10] sm:$0xf]
          %v1276 = vld [vmem:[%s491 + $0x14] sm:$0xf]
          %v1277 = vld [vmem:[%s491 + $0x18] sm:$0xf]
          %v1278 = vld [vmem:[%s491 + $0x1c] sm:$0xf]
          %v1279 = vld [vmem:[%s491 + $0x20] sm:$0xf]
          %v1280 = vld [vmem:[%s491 + $0x24] sm:$0xf]
          %v1281 = vld [vmem:[%s491 + $0x28] sm:$0xf]
          %v1282 = vld [vmem:[%s491 + $0x2c] sm:$0xf]
          %v1283 = vld [vmem:[%s491 + $0x30] sm:$0xf]
          %v1284 = vld [vmem:[%s491 + $0x34] sm:$0xf]
          %v1285 = vld [vmem:[%s491 + $0x38] sm:$0xf]
          %v1286 = vld [vmem:[%s491 + $0x3c] sm:$0xf]
          %v1287 = vld [vmem:[%s512] sm:$0x1]
          %v1289 = vlaneseq
          %v1290 = vshrl.u32 %v1289, 7
          %v1291 = vsub.s32 0, %v1290
          %v1292 = vrot.slane %v1287, %v1291
          %v1310 = vunpack.c.l.b16 %v1271
          %v1311 = vunpack.c.l.b16 %v1272
          %v1312 = vunpack.c.l.b16 %v1273
          %v1313 = vunpack.c.l.b16 %v1274
          %v1314 = vunpack.c.l.b16 %v1275
          %v1315 = vunpack.c.l.b16 %v1276
          %v1316 = vunpack.c.l.b16 %v1277
          %v1317 = vunpack.c.l.b16 %v1278
          %v1318 = vunpack.c.l.b16 %v1279
          %v1319 = vunpack.c.l.b16 %v1280
          %v1320 = vunpack.c.l.b16 %v1281
          %v1321 = vunpack.c.l.b16 %v1282
          %v1322 = vunpack.c.l.b16 %v1283
          %v1323 = vunpack.c.l.b16 %v1284
          %v1324 = vunpack.c.l.b16 %v1285
          %v1325 = vunpack.c.l.b16 %v1286
          %v1326 = vpack.c.b16 %v1311, %v1310
          %v1327 = vpack.c.b16 %v1313, %v1312
          %v1328 = vpack.c.b16 %v1315, %v1314
          %v1329 = vpack.c.b16 %v1317, %v1316
          %v1330 = vpack.c.b16 %v1319, %v1318
          %v1331 = vpack.c.b16 %v1321, %v1320
          %v1332 = vpack.c.b16 %v1323, %v1322
          %v1333 = vpack.c.b16 %v1325, %v1324
          %1342 = vmatprep.subr.bf16.mxu0 0
          %1343 = vmatpush1.bf16.msra.mxu0 %v1333
          %1344 = vmatprep.subr.bf16.mxu0 0
          %1345 = vmatpush1.bf16.msra.mxu0 %v1332
          %1346 = vmatprep.subr.bf16.mxu0 0
          %1347 = vmatpush1.bf16.msra.mxu0 %v1331
          %1348 = vmatprep.subr.bf16.mxu0 0
          %1349 = vmatpush1.bf16.msra.mxu0 %v1330
          %1350 = vmatprep.subr.bf16.mxu0 0
          %1351 = vmatpush1.bf16.msra.mxu0 %v1329
          %1352 = vmatprep.subr.bf16.mxu0 0
          %1353 = vmatpush1.bf16.msra.mxu0 %v1328
          %1354 = vmatprep.subr.bf16.mxu0 0
          %1355 = vmatpush1.bf16.msra.mxu0 %v1327
          %1356 = vmatprep.subr.bf16.mxu0 0
          %1357 = vmatpush1.bf16.msra.mxu0 %v1326
          %1358 = vmatprep.subr.bf16.mxu0 0
          %1359 = vmatpush2.bf16.msra.mxu0 0
          %1360 = vmatprep.subr.bf16.mxu0 0
          %1361 = vmatpush2.bf16.msra.mxu0 0
          %1362 = vmatprep.subr.bf16.mxu0 0
          %1363 = vmatpush2.bf16.msra.mxu0 0
          %1364 = vmatprep.subr.bf16.mxu0 0
          %1365 = vmatpush2.bf16.msra.mxu0 0
          %1366 = vmatprep.subr.bf16.mxu0 0
          %1367 = vmatpush2.bf16.msra.mxu0 0
          %1368 = vmatprep.subr.bf16.mxu0 0
          %1369 = vmatpush2.bf16.msra.mxu0 0
          %1370 = vmatprep.subr.bf16.mxu0 0
          %1371 = vmatpush2.bf16.msra.mxu0 0
          %1372 = vmatprep.subr.bf16.mxu0 0
          %1373 = vmatpush2.bf16.msra.mxu0 0
          %1374 = vmatprep.mubr.bf16.mxu0 0
          %1375 = vmatmul.mubr.bf16.gmra.mxu0 %v1270
          %v1376 = vpop.f32.mrf.mxu0
          %v1377 = vadd.f32 %v1292, %v1376
          %v1378 = vpop.f32.mrf.mxu0
          %v1379 = vpop.f32.mrf.mxu0
          %v1380 = vpop.f32.mrf.mxu0
          %1381 = vdwg.mxu0
          %v1382 = vmax.f32 %v1377, 0.0
          %v1384 = vlaneseq
          %v1385 = vshrl.u32 %v1384, 7
          %v1386 = vsub.s32 0, %v1385
          %v1387 = vrot.slane %v538, %v1386
          %v1389 = vmul.f32 %v1382, %v1387
          %v1390 = vadd.f32 %v1389, %v1269
          %1391 = vst [vmem:[#allocation2] sm:$0xff] %v1390
        $region64: #{adaptive_mlp_forward.1} parent=51 // pred_fallthru
          _
        %p1392 = scmp.eq.s32.totalorder %s29, 3
        // Predicated region
        $region65: #{adaptive_mlp_forward.1} parent=51 // pred_check
          %p1393 = pneg %p1392
        $region66: #{adaptive_mlp_forward.1} parent=51 // pred_check_branch
          %1395 = sbr.rel (%p1393) target = $region68
        $region67: #{adaptive_mlp_forward.1} parent=51 // pred_region
          %v1396 = vld [vmem:[#allocation2] sm:$0xff]
          %v1397 = vpack.c.bf16 %v1396, %v1396
          %v1398 = vld [vmem:[%s6] sm:$0xf]
          %v1399 = vld [vmem:[%s6 + $0x4] sm:$0xf]
          %v1400 = vld [vmem:[%s6 + $0x8] sm:$0xf]
          %v1401 = vld [vmem:[%s6 + $0xc] sm:$0xf]
          %v1402 = vld [vmem:[%s6 + $0x10] sm:$0xf]
          %v1403 = vld [vmem:[%s6 + $0x14] sm:$0xf]
          %v1404 = vld [vmem:[%s6 + $0x18] sm:$0xf]
          %v1405 = vld [vmem:[%s6 + $0x1c] sm:$0xf]
          %v1406 = vld [vmem:[%s6 + $0x20] sm:$0xf]
          %v1407 = vld [vmem:[%s6 + $0x24] sm:$0xf]
          %v1408 = vld [vmem:[%s6 + $0x28] sm:$0xf]
          %v1409 = vld [vmem:[%s6 + $0x2c] sm:$0xf]
          %v1410 = vld [vmem:[%s6 + $0x30] sm:$0xf]
          %v1411 = vld [vmem:[%s6 + $0x34] sm:$0xf]
          %v1412 = vld [vmem:[%s6 + $0x38] sm:$0xf]
          %v1413 = vld [vmem:[%s6 + $0x3c] sm:$0xf]
          %v1414 = vld [vmem:[%s7] sm:$0x1]
          %v1416 = vlaneseq
          %v1417 = vshrl.u32 %v1416, 7
          %v1418 = vsub.s32 0, %v1417
          %v1419 = vrot.slane %v1414, %v1418
          %v1437 = vunpack.c.l.b16 %v1398
          %v1438 = vunpack.c.l.b16 %v1399
          %v1439 = vunpack.c.l.b16 %v1400
          %v1440 = vunpack.c.l.b16 %v1401
          %v1441 = vunpack.c.l.b16 %v1402
          %v1442 = vunpack.c.l.b16 %v1403
          %v1443 = vunpack.c.l.b16 %v1404
          %v1444 = vunpack.c.l.b16 %v1405
          %v1445 = vunpack.c.l.b16 %v1406
          %v1446 = vunpack.c.l.b16 %v1407
          %v1447 = vunpack.c.l.b16 %v1408
          %v1448 = vunpack.c.l.b16 %v1409
          %v1449 = vunpack.c.l.b16 %v1410
          %v1450 = vunpack.c.l.b16 %v1411
          %v1451 = vunpack.c.l.b16 %v1412
          %v1452 = vunpack.c.l.b16 %v1413
          %v1453 = vpack.c.b16 %v1438, %v1437
          %v1454 = vpack.c.b16 %v1440, %v1439
          %v1455 = vpack.c.b16 %v1442, %v1441
          %v1456 = vpack.c.b16 %v1444, %v1443
          %v1457 = vpack.c.b16 %v1446, %v1445
          %v1458 = vpack.c.b16 %v1448, %v1447
          %v1459 = vpack.c.b16 %v1450, %v1449
          %v1460 = vpack.c.b16 %v1452, %v1451
          %1469 = vmatprep.subr.bf16.mxu0 0
          %1470 = vmatpush1.bf16.msra.mxu0 %v1460
          %1471 = vmatprep.subr.bf16.mxu0 0
          %1472 = vmatpush1.bf16.msra.mxu0 %v1459
          %1473 = vmatprep.subr.bf16.mxu0 0
          %1474 = vmatpush1.bf16.msra.mxu0 %v1458
          %1475 = vmatprep.subr.bf16.mxu0 0
          %1476 = vmatpush1.bf16.msra.mxu0 %v1457
          %1477 = vmatprep.subr.bf16.mxu0 0
          %1478 = vmatpush1.bf16.msra.mxu0 %v1456
          %1479 = vmatprep.subr.bf16.mxu0 0
          %1480 = vmatpush1.bf16.msra.mxu0 %v1455
          %1481 = vmatprep.subr.bf16.mxu0 0
          %1482 = vmatpush1.bf16.msra.mxu0 %v1454
          %1483 = vmatprep.subr.bf16.mxu0 0
          %1484 = vmatpush1.bf16.msra.mxu0 %v1453
          %1485 = vmatprep.subr.bf16.mxu0 0
          %1486 = vmatpush2.bf16.msra.mxu0 0
          %1487 = vmatprep.subr.bf16.mxu0 0
          %1488 = vmatpush2.bf16.msra.mxu0 0
          %1489 = vmatprep.subr.bf16.mxu0 0
          %1490 = vmatpush2.bf16.msra.mxu0 0
          %1491 = vmatprep.subr.bf16.mxu0 0
          %1492 = vmatpush2.bf16.msra.mxu0 0
          %1493 = vmatprep.subr.bf16.mxu0 0
          %1494 = vmatpush2.bf16.msra.mxu0 0
          %1495 = vmatprep.subr.bf16.mxu0 0
          %1496 = vmatpush2.bf16.msra.mxu0 0
          %1497 = vmatprep.subr.bf16.mxu0 0
          %1498 = vmatpush2.bf16.msra.mxu0 0
          %1499 = vmatprep.subr.bf16.mxu0 0
          %1500 = vmatpush2.bf16.msra.mxu0 0
          %1501 = vmatprep.mubr.bf16.mxu0 0
          %1502 = vmatmul.mubr.bf16.gmra.mxu0 %v1397
          %v1503 = vpop.f32.mrf.mxu0
          %v1504 = vadd.f32 %v1419, %v1503
          %v1505 = vpop.f32.mrf.mxu0
          %v1506 = vpop.f32.mrf.mxu0
          %v1507 = vpop.f32.mrf.mxu0
          %1508 = vdwg.mxu0
          %1509 = vst [vmem:[%s535] sm:$0xff] %v1504
        $region68: #{adaptive_mlp_forward.1} parent=51 // pred_fallthru
          _
        %p1510 = scmp.lt.s32.totalorder %s27, 1
        %s1511 = scalar_select %p1510, %s27, 1
        %p1512 = scmp.lt.s32.totalorder %s28, 0
        %s1513 = scalar_select %p1512, %s28, 0
        %s1514 = sadd.s32 %s1513, %s1511
        %s1515 = smul.addr %s1514, 8
        %s1516 = scalar_lea.vmem %s9, %s1515
        // Predicated region
        $region69: #{adaptive_mlp_forward.1} parent=51 // pred_check
          %p1517 = pneg %p287
        $region70: #{adaptive_mlp_forward.1} parent=51 // pred_check_branch
          %1519 = sbr.rel (%p1517) target = $region72
        $region71: #{adaptive_mlp_forward.1} parent=51 // pred_region
          _
        $region72: #{adaptive_mlp_forward.1} parent=51 // pred_fallthru
          _
      $region52: #{adaptive_mlp_forward.1} parent=5 // pred_fallthru
        _
      %p1520 = scmp.le.s32.totalorder 2, %s17
      // Predicated region
      $region73: #{adaptive_mlp_forward.1} parent=5 // pred_check
        %p1521 = pneg %p1520
      $region74: #{adaptive_mlp_forward.1} parent=5 // pred_check_branch
        %1523 = sbr.rel (%p1521) target = $region76
      $region75: #{adaptive_mlp_forward.1} parent=5 // pred_region
        %s1524 = ssub.s32 %s17, 2
        // Predicated region
        $region77: #{adaptive_mlp_forward.1} parent=75 // pred_check
          %p1525 = pneg %p293
        $region78: #{adaptive_mlp_forward.1} parent=75 // pred_check_branch
          %1527 = sbr.rel (%p1525) target = $region80
        $region79: #{adaptive_mlp_forward.1} parent=75 // pred_region
          %p1528 = scmp.lt.s32.totalorder %s30, 1
          %s1529 = scalar_select %p1528, %s30, 1
          %p1530 = scmp.lt.s32.totalorder %s31, 0
          %s1531 = scalar_select %p1530, %s31, 0
          %s1532 = sadd.s32 %s1531, %s1529
          %s1533 = smul.addr %s1532, 8
          %s1534 = scalar_lea.vmem %s9, %s1533
        $region80: #{adaptive_mlp_forward.1} parent=75 // pred_fallthru
          _
      $region76: #{adaptive_mlp_forward.1} parent=5 // pred_fallthru
        _
    $region6: #{adaptive_mlp_forward.1} parent=1 // loop_footer
      %s21 = sadd.s32 1, %s17
    $region7: #{adaptive_mlp_forward.1} parent=1 // loop_footer_branch
      %16 = sbr.rel target = $region3
    $region8: #{adaptive_mlp_forward.1} parent=1 // loop_exit
      _
    %1535 = vsyncpa [#allocation6], 1
    %s1536 = scalar_lea.sflag [#allocation6], 1
    %1537 = vsyncpa %s1536, 1

</llo_original>
